<compile_context>
chip_gen: v7x
topology: tpu7x:2x2x1
jax: 0.10.0
libtpu: 0.0.40
codegen_flags: <defaults>
</compile_context>

<pallas_src>
import functools

import jax
import jax.numpy as jnp
from jax import lax
from jax.experimental import pallas as pl
from jax.experimental.pallas import tpu as pltpu

LANE = 128


def _round_up(x, m):
    return (x + m - 1) // m * m


def _mosaic_params(vmem_estimate_bytes, dimension_semantics):
    """Only raise the scoped-VMEM limit when the working set needs it (v5e default ~16 MiB)."""
    kwargs = dict(dimension_semantics=dimension_semantics)
    if vmem_estimate_bytes > 12 * 2**20:
        kwargs["vmem_limit_bytes"] = int(min(2 * vmem_estimate_bytes, 96 * 2**20))
    return pltpu.CompilerParams(**kwargs)


# ----------------------------------------------------------------------------
# Kernel 1: fused input-projection + tanh recurrence for one layer, time chunked
# ----------------------------------------------------------------------------
def _rnn_layer_kernel(x_ref, wih_ref, b_ref, whh_ref, out_ref, h_scr, *, B, tc, unroll):
    """One chunk of `tc` timesteps, flattened time-major.

    x_ref  : (tc*B, K)   layer input rows for this chunk (time-major flat)
    wih_ref: (K, Hp)     input->hidden weight (resident across the grid)
    b_ref  : (1, Hp)     b_ih + b_hh
    whh_ref: (Hp, Hp)    hidden->hidden weight (resident across the grid)
    out_ref: (tc*B, Hp)  per-timestep hidden outputs; also used as the P buffer
    h_scr  : (B, Hp)     VMEM scratch carrying h across chunks (grid steps)
    """
    c = pl.program_id(0)

    # Fused input projection for the whole chunk: one MXU matmul, written straight into the
    # output block (each timestep's rows are overwritten with h_t by the loop below).
    out_ref[...] = (
        jnp.dot(x_ref[...], wih_ref[...], preferred_element_type=jnp.float32) + b_ref[...]
    )

    whh = whh_ref[...]

    # Carry init via select — no zero-store + reload on the chunk-0 critical path.
    h_prev = h_scr[...]
    h0 = jnp.where(c == 0, jnp.zeros_like(h_prev), h_prev)

    def step(i, h):
        row = pl.multiple_of(i * B, B)
        p_i = out_ref[pl.ds(row, B), :]                         # precomputed x_t @ W_ih + b
        h_new = jnp.tanh(p_i + jnp.dot(h, whh, preferred_element_type=jnp.float32))
        out_ref[pl.ds(row, B), :] = h_new
        return h_new

    h_last = lax.fori_loop(0, tc, step, h0, unroll=unroll)
    h_scr[...] = h_last


def rnn_layer(x_flat, w_ih_p, b_p, w_hh_p, *, B, tc):
    """x_flat: (Tp*B, K) time-major flattened layer input (time zero-padded to Tp = n_chunks*tc).
    Returns out_flat: (Tp*B, Hp) hidden states for every timestep, time-major flattened."""
    TpB, K = x_flat.shape
    Hp = w_hh_p.shape[0]
    Tp = TpB // B
    nc = Tp // tc

    est = 4 * (K * Hp + Hp * Hp + Hp            # resident weights + bias
               + 2 * tc * B * (K + Hp)          # double-buffered in/out blocks
               + 8 * Hp)                        # carry scratch (sublane-padded)

    kernel = functools.partial(_rnn_layer_kernel, B=B, tc=tc, unroll=min(8, tc))
    out = pl.pallas_call(
        kernel,
        out_shape=jax.ShapeDtypeStruct((TpB, Hp), jnp.float32),
        grid_spec=pltpu.PrefetchScalarGridSpec(
            num_scalar_prefetch=0,
            grid=(nc,),
            in_specs=[
                pl.BlockSpec((tc * B, K), lambda c: (c, 0)),   # one time chunk, sublane-dense
                pl.BlockSpec((K, Hp), lambda c: (0, 0)),       # W_ih resident
                pl.BlockSpec((1, Hp), lambda c: (0, 0)),       # bias resident
                pl.BlockSpec((Hp, Hp), lambda c: (0, 0)),      # W_hh resident
            ],
            out_specs=pl.BlockSpec((tc * B, Hp), lambda c: (c, 0)),
            scratch_shapes=[pltpu.VMEM((B, Hp), jnp.float32)],
        ),
        compiler_params=_mosaic_params(est, ("arbitrary",)),    # recurrence is sequential in time
    )(x_flat, w_ih_p, b_p, w_hh_p)
    return out
    # TODO(synk): for B >= 16 on v7x, add a leading "parallel" batch-chunk grid axis so the two
    # TensorCores each take half the batch.


# ----------------------------------------------------------------------------
# Kernel 2: FC head — logits and last-layer hidden stream written batch-first
# ----------------------------------------------------------------------------
def _head_kernel(x_ref, w_ref, b_ref, lg_ref, hbf_ref, *, B):
    """x_ref: (tc, B, Hp) time-major chunk.  Writes batch-first blocks:
    lg_ref: (B, tc, Op) logits, hbf_ref: (B, tc, Hp) hidden copy — dense (tc, .) slabs per b."""
    w = w_ref[...]
    bias = b_ref[...]
    x = x_ref[...]
    for b in range(B):                                  # static; B is small
        xb = x[:, b, :]                                 # (tc, Hp)
        lg_ref[b] = jnp.dot(xb, w, preferred_element_type=jnp.float32) + bias
        hbf_ref[b] = xb


def fc_head(out_flat, fc_w_p, fc_b_p, *, B, tc):
    """out_flat: (Tp*B, Hp) time-major hidden stream of the last layer.
    Returns (logits_bf (B, Tp, Op), hidden_bf (B, Tp, Hp)) already batch-first."""
    TpB, Hp = out_flat.shape
    Tp = TpB // B
    Op = fc_w_p.shape[1]
    nc = Tp // tc

    # Enlarge the head chunk toward ~512 rows (memory-bound matmul) while keeping it an exact
    # divisor of the recurrence chunk count.
    k = 1
    for d in range(1, nc + 1):
        if nc % d == 0 and tc * d * B <= 512:
            k = d
    tc_head = tc * k

    x3 = out_flat.reshape(Tp, B, Hp)                    # free row-major view

    est = 4 * (Hp * Op + Op
               + 2 * tc_head * B * Hp                   # double-buffered input blocks
               + 2 * B * tc_head * (Op + Hp))           # double-buffered output blocks

    kernel = functools.partial(_head_kernel, B=B)
    logits_bf, hidden_bf = pl.pallas_call(
        kernel,
        out_shape=(
            jax.ShapeDtypeStruct((B, Tp, Op), jnp.float32),
            jax.ShapeDtypeStruct((B, Tp, Hp), jnp.float32),
        ),
        grid_spec=pltpu.PrefetchScalarGridSpec(
            num_scalar_prefetch=0,
            grid=(Tp // tc_head,),
            in_specs=[
                pl.BlockSpec((tc_head, B, Hp), lambda c: (c, 0, 0)),
                pl.BlockSpec((Hp, Op), lambda c: (0, 0)),       # fc weight resident
                pl.BlockSpec((1, Op), lambda c: (0, 0)),
            ],
            out_specs=(
                pl.BlockSpec((B, tc_head, Op), lambda c: (0, c, 0)),
                pl.BlockSpec((B, tc_head, Hp), lambda c: (0, c, 0)),
            ),
        ),
        compiler_params=_mosaic_params(est, ("parallel",)),
    )(x3, fc_w_p, fc_b_p)
    return logits_bf, hidden_bf


# ----------------------------------------------------------------------------
# Parameters (PyTorch-default init, stored unpadded exactly like the nn.Module)
# ----------------------------------------------------------------------------
def init_params(key, vocab_size, embedding_dim, hidden_size, output_size, num_layers):
    ks = jax.random.split(key, 3 + 4 * num_layers)
    k_emb, k_fc_w, k_fc_b, *k_rnn = ks
    params = {}
    # nn.Embedding default init: N(0, 1)
    params["embedding"] = jax.random.normal(
        k_emb, (vocab_size, embedding_dim), dtype=jnp.float32
    )
    # nn.RNN default init: U(-1/sqrt(H), 1/sqrt(H)) for all weights/biases
    bound = hidden_size ** -0.5
    layers = []
    for l in range(num_layers):
        in_dim = embedding_dim if l == 0 else hidden_size
        kw_ih, kw_hh, kb_ih, kb_hh = k_rnn[4 * l: 4 * l + 4]
        w_ih = jax.random.uniform(kw_ih, (in_dim, hidden_size), jnp.float32, -bound, bound)
        w_hh = jax.random.uniform(kw_hh, (hidden_size, hidden_size), jnp.float32, -bound, bound)
        b_ih = jax.random.uniform(kb_ih, (hidden_size,), jnp.float32, -bound, bound)
        b_hh = jax.random.uniform(kb_hh, (hidden_size,), jnp.float32, -bound, bound)
        layers.append(
            {"w_ih": w_ih, "w_hh": w_hh, "b": (b_ih + b_hh).reshape(1, hidden_size)}
        )
    params["rnn_layers"] = layers
    # nn.Linear default init: U(-1/sqrt(fan_in), 1/sqrt(fan_in))
    fc_bound = hidden_size ** -0.5
    params["fc_w"] = jax.random.uniform(
        k_fc_w, (hidden_size, output_size), jnp.float32, -fc_bound, fc_bound
    )
    params["fc_b"] = jax.random.uniform(
        k_fc_b, (1, output_size), jnp.float32, -fc_bound, fc_bound
    )
    return params


# ----------------------------------------------------------------------------
# Forward (persistent_hidden_state=False path, eval mode, dropout=0)
# ----------------------------------------------------------------------------
@jax.jit
def rnn_forward(params, X_idx):
    """X_idx: (B, T) int32 token ids.
    Returns (logits (B,T,O), hidden (L,B,H), output (B,T,H)) — same as the PyTorch module."""
    B, T = X_idx.shape
    H = params["rnn_layers"][0]["w_hh"].shape[0]
    O = params["fc_w"].shape[1]
    Hp = _round_up(H, LANE)
    Op = _round_up(O, LANE)

    # Time chunk: big enough to amortize per-grid-step overhead, multiple of 8 so the flat
    # (tc*B, .) blocks stay sublane-dense, capped by T.
    tc = min(64, _round_up(T, 8))
    Tp = _round_up(T, tc)

    # Embedding gather directly into time-major flat (T*B, E) layout (indices are tiny).
    x_tbe = jnp.take(params["embedding"], X_idx.T, axis=0).astype(jnp.float32)   # (T, B, E)
    E = x_tbe.shape[-1]
    x_flat = x_tbe.reshape(T * B, E)
    if Tp != T:
        # Zero-pad the trailing time steps; padded steps just run through the recurrence
        # (bounded by tanh) and their rows are sliced off below — no per-step select on the
        # serial h-chain.
        x_flat = jnp.pad(x_flat, ((0, (Tp - T) * B), (0, 0)))

    hiddens = []
    layer_in = x_flat                                         # (Tp*B, K) time-major flat
    for layer in params["rnn_layers"]:
        K = layer_in.shape[1]                                 # E for layer 0, Hp afterwards
        # Zero-pad lane dims to Hp (exact: padded lanes stay 0 through the whole recurrence).
        w_ih_p = jnp.pad(layer["w_ih"], ((0, K - layer["w_ih"].shape[0]), (0, Hp - H)))
        w_hh_p = jnp.pad(layer["w_hh"], ((0, Hp - H), (0, Hp - H)))
        b_p = jnp.pad(layer["b"], ((0, 0), (0, Hp - H)))

        out_flat = rnn_layer(layer_in, w_ih_p, b_p, w_hh_p, B=B, tc=tc)   # (Tp*B, Hp)
        hiddens.append(out_flat[(T - 1) * B: T * B, :H])                  # h_n = h_{T-1}
        layer_in = out_flat
        # TODO(synk): nn.RNN inter-layer dropout (training mode, rate>0) not modeled; rate=0.
        # TODO(synk): wavefront interleave of layer l+1's chunk c under layer l's recurrence
        # (hides the next layer's MXU projection under the latency-bound chain) not implemented.

    hidden = jnp.stack(hiddens, axis=0)                                    # (L, B, H)

    # FC head writes logits and the last layer's hidden stream directly batch-first.
    fc_w_p = jnp.pad(params["fc_w"], ((0, Hp - H), (0, Op - O)))
    fc_b_p = jnp.pad(params["fc_b"], ((0, 0), (0, Op - O)))
    logits_bf, out_bf = fc_head(layer_in, fc_w_p, fc_b_p, B=B, tc=tc)
    logits = logits_bf[:, :T, :O]                                          # (B, T, O)
    output = out_bf[:, :T, :H]                                             # (B, T, H)
    return logits, hidden, output


# ----------------------------------------------------------------------------
# Pure-JAX reference (for correctness check)
# ----------------------------------------------------------------------------
def rnn_forward_ref(params, X_idx):
    B, T = X_idx.shape
    x = jnp.take(params["embedding"], X_idx, axis=0)  # (B, T, E)
    hiddens = []
    layer_in = x
    for layer in params["rnn_layers"]:
        H = layer["w_hh"].shape[0]
        h = jnp.zeros((B, H), jnp.float32)
        outs = []
        for t in range(T):
            h = jnp.tanh(layer_in[:, t, :] @ layer["w_ih"] + h @ layer["w_hh"] + layer["b"])
            outs.append(h)
        layer_in = jnp.stack(outs, axis=1)  # (B, T, H)
        hiddens.append(h)
    output = layer_in
    hidden = jnp.stack(hiddens, axis=0)
    logits = output @ params["fc_w"] + params["fc_b"]
    return logits, hidden, output


# ----------------------------------------------------------------------------
if __name__ == "__main__":
    vocab_size, embedding_dim, hidden_size, output_size = 64, 32, 32, 16
    num_layers = 2
    B, T = 2, 8

    key = jax.random.PRNGKey(0)
    k_params, k_x = jax.random.split(key)
    params = init_params(k_params, vocab_size, embedding_dim, hidden_size,
                         output_size, num_layers)
    X = jax.random.randint(k_x, (B, T), 0, vocab_size, dtype=jnp.int32)

    logits, hidden, output = rnn_forward(params, X)
    jax.block_until_ready((logits, hidden, output))

    ref_logits, ref_hidden, ref_output = rnn_forward_ref(params, X)
    assert logits.shape == (B, T, output_size)
    assert hidden.shape == (num_layers, B, hidden_size)
    assert output.shape == (B, T, hidden_size)
    assert jnp.allclose(logits, ref_logits, atol=5e-5, rtol=5e-5)
    assert jnp.allclose(hidden, ref_hidden, atol=5e-5, rtol=5e-5)
    assert jnp.allclose(output, ref_output, atol=5e-5, rtol=5e-5)

    print("KERNEL_OK")
</pallas_src>

<mosaic_0001>
module attributes {stable_mosaic.version = 11 : i64} {
  func.func @_rnn_layer_kernel(%arg0: i32, %arg1: memref<16x128xf32, #tpu.memory_space<vmem>>, %arg2: memref<128x128xf32, #tpu.memory_space<vmem>>, %arg3: memref<1x128xf32, #tpu.memory_space<vmem>>, %arg4: memref<128x128xf32, #tpu.memory_space<vmem>>, %arg5: memref<16x128xf32, #tpu.memory_space<vmem>>, %arg6: memref<2x128xf32, #tpu.memory_space<vmem>>) attributes {dimension_semantics = [#tpu.dimension_semantics<arbitrary>], iteration_bounds = array<i64: 1>, scalar_prefetch = 0 : i64, scratch_operands = 1 : i64, tpu.core_type = #tpu.core_type<tc>, window_params = [{transform_indices = @transform_0, window_bounds = array<i64: 16, 128>}, {pipeline_mode = #tpu.pipeline_mode<synchronous>, transform_indices = @transform_1, window_bounds = array<i64: 128, 128>}, {pipeline_mode = #tpu.pipeline_mode<synchronous>, transform_indices = @transform_2, window_bounds = array<i64: 1, 128>}, {pipeline_mode = #tpu.pipeline_mode<synchronous>, transform_indices = @transform_3, window_bounds = array<i64: 128, 128>}, {transform_indices = @transform_4, window_bounds = array<i64: 16, 128>}]} {
    %c0 = arith.constant 0 : index
    %c0_0 = arith.constant 0 : index
    %0 = vector.load %arg1[%c0, %c0_0] : memref<16x128xf32, #tpu.memory_space<vmem>>, vector<16x128xf32>
    %c0_1 = arith.constant 0 : index
    %c0_2 = arith.constant 0 : index
    %1 = vector.load %arg2[%c0_1, %c0_2] : memref<128x128xf32, #tpu.memory_space<vmem>>, vector<128x128xf32>
    %cst = arith.constant dense<0.000000e+00> : vector<16x128xf32>
    %2 = tpu.matmul %0, %1, %cst {dimension_numbers = #tpu.dot_dimension_numbers<[1], [0], [0], [1], [0, 0, 1, 1], [], []>} : vector<16x128xf32>, vector<128x128xf32>, vector<16x128xf32> -> vector<16x128xf32>
    %c0_3 = arith.constant 0 : index
    %c0_4 = arith.constant 0 : index
    %3 = vector.load %arg3[%c0_3, %c0_4] : memref<1x128xf32, #tpu.memory_space<vmem>>, vector<1x128xf32>
    %4 = vector.broadcast %3 : vector<1x128xf32> to vector<16x128xf32>
    %5 = arith.addf %2, %4 : vector<16x128xf32>
    %c0_5 = arith.constant 0 : index
    %c0_6 = arith.constant 0 : index
    %6 = vector.load %arg5[%c0_5, %c0_6] : memref<16x128xf32, #tpu.memory_space<vmem>>, vector<16x128xf32>
    tpu.vector_store %arg5[%c0_5, %c0_6], %5 {strides = array<i32>} : memref<16x128xf32, #tpu.memory_space<vmem>>, vector<16x128xf32>,
    %c0_7 = arith.constant 0 : index
    %c0_8 = arith.constant 0 : index
    %7 = vector.load %arg4[%c0_7, %c0_8] : memref<128x128xf32, #tpu.memory_space<vmem>>, vector<128x128xf32>
    %c0_9 = arith.constant 0 : index
    %c0_10 = arith.constant 0 : index
    %8 = vector.load %arg6[%c0_9, %c0_10] : memref<2x128xf32, #tpu.memory_space<vmem>>, vector<2x128xf32>
    %c0_i32 = arith.constant 0 : i32
    %9 = arith.cmpi eq, %arg0, %c0_i32 : i32
    %cst_11 = arith.constant 0.000000e+00 : f32
    %10 = vector.broadcast %cst_11 : f32 to vector<2x128xf32>
    %11 = arith.select %9, %10, %8 : vector<2x128xf32>
    %c0_i32_12 = arith.constant 0 : i32
    %c2_i32 = arith.constant 2 : i32
    %12 = arith.muli %c0_i32_12, %c2_i32 : i32
    %13 = tpu.assume_multiple %12, 2 : i32
    %14 = arith.index_cast %13 : i32 to index
    %c0_13 = arith.constant 0 : index
    %15 = vector.load %arg5[%14, %c0_13] : memref<16x128xf32, #tpu.memory_space<vmem>>, vector<2x128xf32>
    %cst_14 = arith.constant dense<0.000000e+00> : vector<2x128xf32>
    %16 = tpu.matmul %11, %7, %cst_14 {dimension_numbers = #tpu.dot_dimension_numbers<[1], [0], [0], [1], [0, 0, 1, 1], [], []>} : vector<2x128xf32>, vector<128x128xf32>, vector<2x128xf32> -> vector<2x128xf32>
    %17 = arith.addf %15, %16 : vector<2x128xf32>
    %18 = math.tanh %17 : vector<2x128xf32>
    %19 = arith.index_cast %13 : i32 to index
    %c0_15 = arith.constant 0 : index
    %20 = vector.load %arg5[%19, %c0_15] : memref<16x128xf32, #tpu.memory_space<vmem>>, vector<2x128xf32>
    tpu.vector_store %arg5[%19, %c0_15], %18 {strides = array<i32>} : memref<16x128xf32, #tpu.memory_space<vmem>>, vector<2x128xf32>,
    %c1_i32 = arith.constant 1 : i32
    %c2_i32_16 = arith.constant 2 : i32
    %21 = arith.muli %c1_i32, %c2_i32_16 : i32
    %22 = tpu.assume_multiple %21, 2 : i32
    %23 = arith.index_cast %22 : i32 to index
    %c0_17 = arith.constant 0 : index
    %24 = vector.load %arg5[%23, %c0_17] : memref<16x128xf32, #tpu.memory_space<vmem>>, vector<2x128xf32>
    %cst_18 = arith.constant dense<0.000000e+00> : vector<2x128xf32>
    %25 = tpu.matmul %18, %7, %cst_18 {dimension_numbers = #tpu.dot_dimension_numbers<[1], [0], [0], [1], [0, 0, 1, 1], [], []>} : vector<2x128xf32>, vector<128x128xf32>, vector<2x128xf32> -> vector<2x128xf32>
    %26 = arith.addf %24, %25 : vector<2x128xf32>
    %27 = math.tanh %26 : vector<2x128xf32>
    %28 = arith.index_cast %22 : i32 to index
    %c0_19 = arith.constant 0 : index
    %29 = vector.load %arg5[%28, %c0_19] : memref<16x128xf32, #tpu.memory_space<vmem>>, vector<2x128xf32>
    tpu.vector_store %arg5[%28, %c0_19], %27 {strides = array<i32>} : memref<16x128xf32, #tpu.memory_space<vmem>>, vector<2x128xf32>,
    %c2_i32_20 = arith.constant 2 : i32
    %c2_i32_21 = arith.constant 2 : i32
    %30 = arith.muli %c2_i32_20, %c2_i32_21 : i32
    %31 = tpu.assume_multiple %30, 2 : i32
    %32 = arith.index_cast %31 : i32 to index
    %c0_22 = arith.constant 0 : index
    %33 = vector.load %arg5[%32, %c0_22] : memref<16x128xf32, #tpu.memory_space<vmem>>, vector<2x128xf32>
    %cst_23 = arith.constant dense<0.000000e+00> : vector<2x128xf32>
    %34 = tpu.matmul %27, %7, %cst_23 {dimension_numbers = #tpu.dot_dimension_numbers<[1], [0], [0], [1], [0, 0, 1, 1], [], []>} : vector<2x128xf32>, vector<128x128xf32>, vector<2x128xf32> -> vector<2x128xf32>
    %35 = arith.addf %33, %34 : vector<2x128xf32>
    %36 = math.tanh %35 : vector<2x128xf32>
    %37 = arith.index_cast %31 : i32 to index
    %c0_24 = arith.constant 0 : index
    %38 = vector.load %arg5[%37, %c0_24] : memref<16x128xf32, #tpu.memory_space<vmem>>, vector<2x128xf32>
    tpu.vector_store %arg5[%37, %c0_24], %36 {strides = array<i32>} : memref<16x128xf32, #tpu.memory_space<vmem>>, vector<2x128xf32>,
    %c3_i32 = arith.constant 3 : i32
    %c2_i32_25 = arith.constant 2 : i32
    %39 = arith.muli %c3_i32, %c2_i32_25 : i32
    %40 = tpu.assume_multiple %39, 2 : i32
    %41 = arith.index_cast %40 : i32 to index
    %c0_26 = arith.constant 0 : index
    %42 = vector.load %arg5[%41, %c0_26] : memref<16x128xf32, #tpu.memory_space<vmem>>, vector<2x128xf32>
    %cst_27 = arith.constant dense<0.000000e+00> : vector<2x128xf32>
    %43 = tpu.matmul %36, %7, %cst_27 {dimension_numbers = #tpu.dot_dimension_numbers<[1], [0], [0], [1], [0, 0, 1, 1], [], []>} : vector<2x128xf32>, vector<128x128xf32>, vector<2x128xf32> -> vector<2x128xf32>
    %44 = arith.addf %42, %43 : vector<2x128xf32>
    %45 = math.tanh %44 : vector<2x128xf32>
    %46 = arith.index_cast %40 : i32 to index
    %c0_28 = arith.constant 0 : index
    %47 = vector.load %arg5[%46, %c0_28] : memref<16x128xf32, #tpu.memory_space<vmem>>, vector<2x128xf32>
    tpu.vector_store %arg5[%46, %c0_28], %45 {strides = array<i32>} : memref<16x128xf32, #tpu.memory_space<vmem>>, vector<2x128xf32>,
    %c4_i32 = arith.constant 4 : i32
    %c2_i32_29 = arith.constant 2 : i32
    %48 = arith.muli %c4_i32, %c2_i32_29 : i32
    %49 = tpu.assume_multiple %48, 2 : i32
    %50 = arith.index_cast %49 : i32 to index
    %c0_30 = arith.constant 0 : index
    %51 = vector.load %arg5[%50, %c0_30] : memref<16x128xf32, #tpu.memory_space<vmem>>, vector<2x128xf32>
    %cst_31 = arith.constant dense<0.000000e+00> : vector<2x128xf32>
    %52 = tpu.matmul %45, %7, %cst_31 {dimension_numbers = #tpu.dot_dimension_numbers<[1], [0], [0], [1], [0, 0, 1, 1], [], []>} : vector<2x128xf32>, vector<128x128xf32>, vector<2x128xf32> -> vector<2x128xf32>
    %53 = arith.addf %51, %52 : vector<2x128xf32>
    %54 = math.tanh %53 : vector<2x128xf32>
    %55 = arith.index_cast %49 : i32 to index
    %c0_32 = arith.constant 0 : index
    %56 = vector.load %arg5[%55, %c0_32] : memref<16x128xf32, #tpu.memory_space<vmem>>, vector<2x128xf32>
    tpu.vector_store %arg5[%55, %c0_32], %54 {strides = array<i32>} : memref<16x128xf32, #tpu.memory_space<vmem>>, vector<2x128xf32>,
    %c5_i32 = arith.constant 5 : i32
    %c2_i32_33 = arith.constant 2 : i32
    %57 = arith.muli %c5_i32, %c2_i32_33 : i32
    %58 = tpu.assume_multiple %57, 2 : i32
    %59 = arith.index_cast %58 : i32 to index
    %c0_34 = arith.constant 0 : index
    %60 = vector.load %arg5[%59, %c0_34] : memref<16x128xf32, #tpu.memory_space<vmem>>, vector<2x128xf32>
    %cst_35 = arith.constant dense<0.000000e+00> : vector<2x128xf32>
    %61 = tpu.matmul %54, %7, %cst_35 {dimension_numbers = #tpu.dot_dimension_numbers<[1], [0], [0], [1], [0, 0, 1, 1], [], []>} : vector<2x128xf32>, vector<128x128xf32>, vector<2x128xf32> -> vector<2x128xf32>
    %62 = arith.addf %60, %61 : vector<2x128xf32>
    %63 = math.tanh %62 : vector<2x128xf32>
    %64 = arith.index_cast %58 : i32 to index
    %c0_36 = arith.constant 0 : index
    %65 = vector.load %arg5[%64, %c0_36] : memref<16x128xf32, #tpu.memory_space<vmem>>, vector<2x128xf32>
    tpu.vector_store %arg5[%64, %c0_36], %63 {strides = array<i32>} : memref<16x128xf32, #tpu.memory_space<vmem>>, vector<2x128xf32>,
    %c6_i32 = arith.constant 6 : i32
    %c2_i32_37 = arith.constant 2 : i32
    %66 = arith.muli %c6_i32, %c2_i32_37 : i32
    %67 = tpu.assume_multiple %66, 2 : i32
    %68 = arith.index_cast %67 : i32 to index
    %c0_38 = arith.constant 0 : index
    %69 = vector.load %arg5[%68, %c0_38] : memref<16x128xf32, #tpu.memory_space<vmem>>, vector<2x128xf32>
    %cst_39 = arith.constant dense<0.000000e+00> : vector<2x128xf32>
    %70 = tpu.matmul %63, %7, %cst_39 {dimension_numbers = #tpu.dot_dimension_numbers<[1], [0], [0], [1], [0, 0, 1, 1], [], []>} : vector<2x128xf32>, vector<128x128xf32>, vector<2x128xf32> -> vector<2x128xf32>
    %71 = arith.addf %69, %70 : vector<2x128xf32>
    %72 = math.tanh %71 : vector<2x128xf32>
    %73 = arith.index_cast %67 : i32 to index
    %c0_40 = arith.constant 0 : index
    %74 = vector.load %arg5[%73, %c0_40] : memref<16x128xf32, #tpu.memory_space<vmem>>, vector<2x128xf32>
    tpu.vector_store %arg5[%73, %c0_40], %72 {strides = array<i32>} : memref<16x128xf32, #tpu.memory_space<vmem>>, vector<2x128xf32>,
    %c7_i32 = arith.constant 7 : i32
    %c2_i32_41 = arith.constant 2 : i32
    %75 = arith.muli %c7_i32, %c2_i32_41 : i32
    %76 = tpu.assume_multiple %75, 2 : i32
    %77 = arith.index_cast %76 : i32 to index
    %c0_42 = arith.constant 0 : index
    %78 = vector.load %arg5[%77, %c0_42] : memref<16x128xf32, #tpu.memory_space<vmem>>, vector<2x128xf32>
    %cst_43 = arith.constant dense<0.000000e+00> : vector<2x128xf32>
    %79 = tpu.matmul %72, %7, %cst_43 {dimension_numbers = #tpu.dot_dimension_numbers<[1], [0], [0], [1], [0, 0, 1, 1], [], []>} : vector<2x128xf32>, vector<128x128xf32>, vector<2x128xf32> -> vector<2x128xf32>
    %80 = arith.addf %78, %79 : vector<2x128xf32>
    %81 = math.tanh %80 : vector<2x128xf32>
    %82 = arith.index_cast %76 : i32 to index
    %c0_44 = arith.constant 0 : index
    %83 = vector.load %arg5[%82, %c0_44] : memref<16x128xf32, #tpu.memory_space<vmem>>, vector<2x128xf32>
    tpu.vector_store %arg5[%82, %c0_44], %81 {strides = array<i32>} : memref<16x128xf32, #tpu.memory_space<vmem>>, vector<2x128xf32>,
    %c8_i32 = arith.constant 8 : i32
    %c0_45 = arith.constant 0 : index
    %c0_46 = arith.constant 0 : index
    %84 = vector.load %arg6[%c0_45, %c0_46] : memref<2x128xf32, #tpu.memory_space<vmem>>, vector<2x128xf32>
    tpu.vector_store %arg6[%c0_45, %c0_46], %81 {strides = array<i32>} : memref<2x128xf32, #tpu.memory_space<vmem>>, vector<2x128xf32>,
    return
  }
  func.func @transform_0(%arg0: i32) -> (i32, i32) {
    %c0_i32 = arith.constant 0 : i32
    %c0_i32_0 = arith.constant 0 : i32
    return %arg0, %c0_i32 : i32, i32
  }
  func.func @transform_1(%arg0: i32) -> (i32, i32) {
    %c0_i32 = arith.constant 0 : i32
    %c0_i32_0 = arith.constant 0 : i32
    %c0_i32_1 = arith.constant 0 : i32
    return %c0_i32, %c0_i32_0 : i32, i32
  }
  func.func @transform_2(%arg0: i32) -> (i32, i32) {
    %c0_i32 = arith.constant 0 : i32
    %c0_i32_0 = arith.constant 0 : i32
    %c0_i32_1 = arith.constant 0 : i32
    return %c0_i32, %c0_i32_0 : i32, i32
  }
  func.func @transform_3(%arg0: i32) -> (i32, i32) {
    %c0_i32 = arith.constant 0 : i32
    %c0_i32_0 = arith.constant 0 : i32
    %c0_i32_1 = arith.constant 0 : i32
    return %c0_i32, %c0_i32_0 : i32, i32
  }
  func.func @transform_4(%arg0: i32) -> (i32, i32) {
    %c0_i32 = arith.constant 0 : i32
    %c0_i32_0 = arith.constant 0 : i32
    return %arg0, %c0_i32 : i32, i32
  }
}

module attributes {stable_mosaic.version = 11 : i64} {
  func.func @_rnn_layer_kernel(%arg0: i32, %arg1: memref<16x32xf32, #tpu.memory_space<vmem>>, %arg2: memref<32x128xf32, #tpu.memory_space<vmem>>, %arg3: memref<1x128xf32, #tpu.memory_space<vmem>>, %arg4: memref<128x128xf32, #tpu.memory_space<vmem>>, %arg5: memref<16x128xf32, #tpu.memory_space<vmem>>, %arg6: memref<2x128xf32, #tpu.memory_space<vmem>>) attributes {dimension_semantics = [#tpu.dimension_semantics<arbitrary>], iteration_bounds = array<i64: 1>, scalar_prefetch = 0 : i64, scratch_operands = 1 : i64, tpu.core_type = #tpu.core_type<tc>, window_params = [{transform_indices = @transform_0, window_bounds = array<i64: 16, 32>}, {pipeline_mode = #tpu.pipeline_mode<synchronous>, transform_indices = @transform_1, window_bounds = array<i64: 32, 128>}, {pipeline_mode = #tpu.pipeline_mode<synchronous>, transform_indices = @transform_2, window_bounds = array<i64: 1, 128>}, {pipeline_mode = #tpu.pipeline_mode<synchronous>, transform_indices = @transform_3, window_bounds = array<i64: 128, 128>}, {transform_indices = @transform_4, window_bounds = array<i64: 16, 128>}]} {
    %c0 = arith.constant 0 : index
    %c0_0 = arith.constant 0 : index
    %0 = vector.load %arg1[%c0, %c0_0] : memref<16x32xf32, #tpu.memory_space<vmem>>, vector<16x32xf32>
    %c0_1 = arith.constant 0 : index
    %c0_2 = arith.constant 0 : index
    %1 = vector.load %arg2[%c0_1, %c0_2] : memref<32x128xf32, #tpu.memory_space<vmem>>, vector<32x128xf32>
    %cst = arith.constant dense<0.000000e+00> : vector<16x128xf32>
    %2 = tpu.matmul %0, %1, %cst {dimension_numbers = #tpu.dot_dimension_numbers<[1], [0], [0], [1], [0, 0, 1, 1], [], []>} : vector<16x32xf32>, vector<32x128xf32>, vector<16x128xf32> -> vector<16x128xf32>
    %c0_3 = arith.constant 0 : index
    %c0_4 = arith.constant 0 : index
    %3 = vector.load %arg3[%c0_3, %c0_4] : memref<1x128xf32, #tpu.memory_space<vmem>>, vector<1x128xf32>
    %4 = vector.broadcast %3 : vector<1x128xf32> to vector<16x128xf32>
    %5 = arith.addf %2, %4 : vector<16x128xf32>
    %c0_5 = arith.constant 0 : index
    %c0_6 = arith.constant 0 : index
    %6 = vector.load %arg5[%c0_5, %c0_6] : memref<16x128xf32, #tpu.memory_space<vmem>>, vector<16x128xf32>
    tpu.vector_store %arg5[%c0_5, %c0_6], %5 {strides = array<i32>} : memref<16x128xf32, #tpu.memory_space<vmem>>, vector<16x128xf32>,
    %c0_7 = arith.constant 0 : index
    %c0_8 = arith.constant 0 : index
    %7 = vector.load %arg4[%c0_7, %c0_8] : memref<128x128xf32, #tpu.memory_space<vmem>>, vector<128x128xf32>
    %c0_9 = arith.constant 0 : index
    %c0_10 = arith.constant 0 : index
    %8 = vector.load %arg6[%c0_9, %c0_10] : memref<2x128xf32, #tpu.memory_space<vmem>>, vector<2x128xf32>
    %c0_i32 = arith.constant 0 : i32
    %9 = arith.cmpi eq, %arg0, %c0_i32 : i32
    %cst_11 = arith.constant 0.000000e+00 : f32
    %10 = vector.broadcast %cst_11 : f32 to vector<2x128xf32>
    %11 = arith.select %9, %10, %8 : vector<2x128xf32>
    %c0_i32_12 = arith.constant 0 : i32
    %c2_i32 = arith.constant 2 : i32
    %12 = arith.muli %c0_i32_12, %c2_i32 : i32
    %13 = tpu.assume_multiple %12, 2 : i32
    %14 = arith.index_cast %13 : i32 to index
    %c0_13 = arith.constant 0 : index
    %15 = vector.load %arg5[%14, %c0_13] : memref<16x128xf32, #tpu.memory_space<vmem>>, vector<2x128xf32>
    %cst_14 = arith.constant dense<0.000000e+00> : vector<2x128xf32>
    %16 = tpu.matmul %11, %7, %cst_14 {dimension_numbers = #tpu.dot_dimension_numbers<[1], [0], [0], [1], [0, 0, 1, 1], [], []>} : vector<2x128xf32>, vector<128x128xf32>, vector<2x128xf32> -> vector<2x128xf32>
    %17 = arith.addf %15, %16 : vector<2x128xf32>
    %18 = math.tanh %17 : vector<2x128xf32>
    %19 = arith.index_cast %13 : i32 to index
    %c0_15 = arith.constant 0 : index
    %20 = vector.load %arg5[%19, %c0_15] : memref<16x128xf32, #tpu.memory_space<vmem>>, vector<2x128xf32>
    tpu.vector_store %arg5[%19, %c0_15], %18 {strides = array<i32>} : memref<16x128xf32, #tpu.memory_space<vmem>>, vector<2x128xf32>,
    %c1_i32 = arith.constant 1 : i32
    %c2_i32_16 = arith.constant 2 : i32
    %21 = arith.muli %c1_i32, %c2_i32_16 : i32
    %22 = tpu.assume_multiple %21, 2 : i32
    %23 = arith.index_cast %22 : i32 to index
    %c0_17 = arith.constant 0 : index
    %24 = vector.load %arg5[%23, %c0_17] : memref<16x128xf32, #tpu.memory_space<vmem>>, vector<2x128xf32>
    %cst_18 = arith.constant dense<0.000000e+00> : vector<2x128xf32>
    %25 = tpu.matmul %18, %7, %cst_18 {dimension_numbers = #tpu.dot_dimension_numbers<[1], [0], [0], [1], [0, 0, 1, 1], [], []>} : vector<2x128xf32>, vector<128x128xf32>, vector<2x128xf32> -> vector<2x128xf32>
    %26 = arith.addf %24, %25 : vector<2x128xf32>
    %27 = math.tanh %26 : vector<2x128xf32>
    %28 = arith.index_cast %22 : i32 to index
    %c0_19 = arith.constant 0 : index
    %29 = vector.load %arg5[%28, %c0_19] : memref<16x128xf32, #tpu.memory_space<vmem>>, vector<2x128xf32>
    tpu.vector_store %arg5[%28, %c0_19], %27 {strides = array<i32>} : memref<16x128xf32, #tpu.memory_space<vmem>>, vector<2x128xf32>,
    %c2_i32_20 = arith.constant 2 : i32
    %c2_i32_21 = arith.constant 2 : i32
    %30 = arith.muli %c2_i32_20, %c2_i32_21 : i32
    %31 = tpu.assume_multiple %30, 2 : i32
    %32 = arith.index_cast %31 : i32 to index
    %c0_22 = arith.constant 0 : index
    %33 = vector.load %arg5[%32, %c0_22] : memref<16x128xf32, #tpu.memory_space<vmem>>, vector<2x128xf32>
    %cst_23 = arith.constant dense<0.000000e+00> : vector<2x128xf32>
    %34 = tpu.matmul %27, %7, %cst_23 {dimension_numbers = #tpu.dot_dimension_numbers<[1], [0], [0], [1], [0, 0, 1, 1], [], []>} : vector<2x128xf32>, vector<128x128xf32>, vector<2x128xf32> -> vector<2x128xf32>
    %35 = arith.addf %33, %34 : vector<2x128xf32>
    %36 = math.tanh %35 : vector<2x128xf32>
    %37 = arith.index_cast %31 : i32 to index
    %c0_24 = arith.constant 0 : index
    %38 = vector.load %arg5[%37, %c0_24] : memref<16x128xf32, #tpu.memory_space<vmem>>, vector<2x128xf32>
    tpu.vector_store %arg5[%37, %c0_24], %36 {strides = array<i32>} : memref<16x128xf32, #tpu.memory_space<vmem>>, vector<2x128xf32>,
    %c3_i32 = arith.constant 3 : i32
    %c2_i32_25 = arith.constant 2 : i32
    %39 = arith.muli %c3_i32, %c2_i32_25 : i32
    %40 = tpu.assume_multiple %39, 2 : i32
    %41 = arith.index_cast %40 : i32 to index
    %c0_26 = arith.constant 0 : index
    %42 = vector.load %arg5[%41, %c0_26] : memref<16x128xf32, #tpu.memory_space<vmem>>, vector<2x128xf32>
    %cst_27 = arith.constant dense<0.000000e+00> : vector<2x128xf32>
    %43 = tpu.matmul %36, %7, %cst_27 {dimension_numbers = #tpu.dot_dimension_numbers<[1], [0], [0], [1], [0, 0, 1, 1], [], []>} : vector<2x128xf32>, vector<128x128xf32>, vector<2x128xf32> -> vector<2x128xf32>
    %44 = arith.addf %42, %43 : vector<2x128xf32>
    %45 = math.tanh %44 : vector<2x128xf32>
    %46 = arith.index_cast %40 : i32 to index
    %c0_28 = arith.constant 0 : index
    %47 = vector.load %arg5[%46, %c0_28] : memref<16x128xf32, #tpu.memory_space<vmem>>, vector<2x128xf32>
    tpu.vector_store %arg5[%46, %c0_28], %45 {strides = array<i32>} : memref<16x128xf32, #tpu.memory_space<vmem>>, vector<2x128xf32>,
    %c4_i32 = arith.constant 4 : i32
    %c2_i32_29 = arith.constant 2 : i32
    %48 = arith.muli %c4_i32, %c2_i32_29 : i32
    %49 = tpu.assume_multiple %48, 2 : i32
    %50 = arith.index_cast %49 : i32 to index
    %c0_30 = arith.constant 0 : index
    %51 = vector.load %arg5[%50, %c0_30] : memref<16x128xf32, #tpu.memory_space<vmem>>, vector<2x128xf32>
    %cst_31 = arith.constant dense<0.000000e+00> : vector<2x128xf32>
    %52 = tpu.matmul %45, %7, %cst_31 {dimension_numbers = #tpu.dot_dimension_numbers<[1], [0], [0], [1], [0, 0, 1, 1], [], []>} : vector<2x128xf32>, vector<128x128xf32>, vector<2x128xf32> -> vector<2x128xf32>
    %53 = arith.addf %51, %52 : vector<2x128xf32>
    %54 = math.tanh %53 : vector<2x128xf32>
    %55 = arith.index_cast %49 : i32 to index
    %c0_32 = arith.constant 0 : index
    %56 = vector.load %arg5[%55, %c0_32] : memref<16x128xf32, #tpu.memory_space<vmem>>, vector<2x128xf32>
    tpu.vector_store %arg5[%55, %c0_32], %54 {strides = array<i32>} : memref<16x128xf32, #tpu.memory_space<vmem>>, vector<2x128xf32>,
    %c5_i32 = arith.constant 5 : i32
    %c2_i32_33 = arith.constant 2 : i32
    %57 = arith.muli %c5_i32, %c2_i32_33 : i32
    %58 = tpu.assume_multiple %57, 2 : i32
    %59 = arith.index_cast %58 : i32 to index
    %c0_34 = arith.constant 0 : index
    %60 = vector.load %arg5[%59, %c0_34] : memref<16x128xf32, #tpu.memory_space<vmem>>, vector<2x128xf32>
    %cst_35 = arith.constant dense<0.000000e+00> : vector<2x128xf32>
    %61 = tpu.matmul %54, %7, %cst_35 {dimension_numbers = #tpu.dot_dimension_numbers<[1], [0], [0], [1], [0, 0, 1, 1], [], []>} : vector<2x128xf32>, vector<128x128xf32>, vector<2x128xf32> -> vector<2x128xf32>
    %62 = arith.addf %60, %61 : vector<2x128xf32>
    %63 = math.tanh %62 : vector<2x128xf32>
    %64 = arith.index_cast %58 : i32 to index
    %c0_36 = arith.constant 0 : index
    %65 = vector.load %arg5[%64, %c0_36] : memref<16x128xf32, #tpu.memory_space<vmem>>, vector<2x128xf32>
    tpu.vector_store %arg5[%64, %c0_36], %63 {strides = array<i32>} : memref<16x128xf32, #tpu.memory_space<vmem>>, vector<2x128xf32>,
    %c6_i32 = arith.constant 6 : i32
    %c2_i32_37 = arith.constant 2 : i32
    %66 = arith.muli %c6_i32, %c2_i32_37 : i32
    %67 = tpu.assume_multiple %66, 2 : i32
    %68 = arith.index_cast %67 : i32 to index
    %c0_38 = arith.constant 0 : index
    %69 = vector.load %arg5[%68, %c0_38] : memref<16x128xf32, #tpu.memory_space<vmem>>, vector<2x128xf32>
    %cst_39 = arith.constant dense<0.000000e+00> : vector<2x128xf32>
    %70 = tpu.matmul %63, %7, %cst_39 {dimension_numbers = #tpu.dot_dimension_numbers<[1], [0], [0], [1], [0, 0, 1, 1], [], []>} : vector<2x128xf32>, vector<128x128xf32>, vector<2x128xf32> -> vector<2x128xf32>
    %71 = arith.addf %69, %70 : vector<2x128xf32>
    %72 = math.tanh %71 : vector<2x128xf32>
    %73 = arith.index_cast %67 : i32 to index
    %c0_40 = arith.constant 0 : index
    %74 = vector.load %arg5[%73, %c0_40] : memref<16x128xf32, #tpu.memory_space<vmem>>, vector<2x128xf32>
    tpu.vector_store %arg5[%73, %c0_40], %72 {strides = array<i32>} : memref<16x128xf32, #tpu.memory_space<vmem>>, vector<2x128xf32>,
    %c7_i32 = arith.constant 7 : i32
    %c2_i32_41 = arith.constant 2 : i32
    %75 = arith.muli %c7_i32, %c2_i32_41 : i32
    %76 = tpu.assume_multiple %75, 2 : i32
    %77 = arith.index_cast %76 : i32 to index
    %c0_42 = arith.constant 0 : index
    %78 = vector.load %arg5[%77, %c0_42] : memref<16x128xf32, #tpu.memory_space<vmem>>, vector<2x128xf32>
    %cst_43 = arith.constant dense<0.000000e+00> : vector<2x128xf32>
    %79 = tpu.matmul %72, %7, %cst_43 {dimension_numbers = #tpu.dot_dimension_numbers<[1], [0], [0], [1], [0, 0, 1, 1], [], []>} : vector<2x128xf32>, vector<128x128xf32>, vector<2x128xf32> -> vector<2x128xf32>
    %80 = arith.addf %78, %79 : vector<2x128xf32>
    %81 = math.tanh %80 : vector<2x128xf32>
    %82 = arith.index_cast %76 : i32 to index
    %c0_44 = arith.constant 0 : index
    %83 = vector.load %arg5[%82, %c0_44] : memref<16x128xf32, #tpu.memory_space<vmem>>, vector<2x128xf32>
    tpu.vector_store %arg5[%82, %c0_44], %81 {strides = array<i32>} : memref<16x128xf32, #tpu.memory_space<vmem>>, vector<2x128xf32>,
    %c8_i32 = arith.constant 8 : i32
    %c0_45 = arith.constant 0 : index
    %c0_46 = arith.constant 0 : index
    %84 = vector.load %arg6[%c0_45, %c0_46] : memref<2x128xf32, #tpu.memory_space<vmem>>, vector<2x128xf32>
    tpu.vector_store %arg6[%c0_45, %c0_46], %81 {strides = array<i32>} : memref<2x128xf32, #tpu.memory_space<vmem>>, vector<2x128xf32>,
    return
  }
  func.func @transform_0(%arg0: i32) -> (i32, i32) {
    %c0_i32 = arith.constant 0 : i32
    %c0_i32_0 = arith.constant 0 : i32
    return %arg0, %c0_i32 : i32, i32
  }
  func.func @transform_1(%arg0: i32) -> (i32, i32) {
    %c0_i32 = arith.constant 0 : i32
    %c0_i32_0 = arith.constant 0 : i32
    %c0_i32_1 = arith.constant 0 : i32
    return %c0_i32, %c0_i32_0 : i32, i32
  }
  func.func @transform_2(%arg0: i32) -> (i32, i32) {
    %c0_i32 = arith.constant 0 : i32
    %c0_i32_0 = arith.constant 0 : i32
    %c0_i32_1 = arith.constant 0 : i32
    return %c0_i32, %c0_i32_0 : i32, i32
  }
  func.func @transform_3(%arg0: i32) -> (i32, i32) {
    %c0_i32 = arith.constant 0 : i32
    %c0_i32_0 = arith.constant 0 : i32
    %c0_i32_1 = arith.constant 0 : i32
    return %c0_i32, %c0_i32_0 : i32, i32
  }
  func.func @transform_4(%arg0: i32) -> (i32, i32) {
    %c0_i32 = arith.constant 0 : i32
    %c0_i32_0 = arith.constant 0 : i32
    return %arg0, %c0_i32 : i32, i32
  }
}

module attributes {stable_mosaic.version = 11 : i64} {
  func.func @_head_kernel(%arg0: i32, %arg1: memref<8x2x128xf32, #tpu.memory_space<vmem>>, %arg2: memref<128x128xf32, #tpu.memory_space<vmem>>, %arg3: memref<1x128xf32, #tpu.memory_space<vmem>>, %arg4: memref<2x8x128xf32, #tpu.memory_space<vmem>>, %arg5: memref<2x8x128xf32, #tpu.memory_space<vmem>>) attributes {dimension_semantics = [#tpu.dimension_semantics<parallel>], iteration_bounds = array<i64: 1>, scalar_prefetch = 0 : i64, scratch_operands = 0 : i64, tpu.core_type = #tpu.core_type<tc>, window_params = [{transform_indices = @transform_0, window_bounds = array<i64: 8, 2, 128>}, {pipeline_mode = #tpu.pipeline_mode<synchronous>, transform_indices = @transform_1, window_bounds = array<i64: 128, 128>}, {pipeline_mode = #tpu.pipeline_mode<synchronous>, transform_indices = @transform_2, window_bounds = array<i64: 1, 128>}, {transform_indices = @transform_3, window_bounds = array<i64: 2, 8, 128>}, {transform_indices = @transform_4, window_bounds = array<i64: 2, 8, 128>}]} {
    %c0 = arith.constant 0 : index
    %c0_0 = arith.constant 0 : index
    %0 = vector.load %arg2[%c0, %c0_0] : memref<128x128xf32, #tpu.memory_space<vmem>>, vector<128x128xf32>
    %c0_1 = arith.constant 0 : index
    %c0_2 = arith.constant 0 : index
    %1 = vector.load %arg3[%c0_1, %c0_2] : memref<1x128xf32, #tpu.memory_space<vmem>>, vector<1x128xf32>
    %c0_3 = arith.constant 0 : index
    %c0_4 = arith.constant 0 : index
    %c0_5 = arith.constant 0 : index
    %2 = vector.load %arg1[%c0_3, %c0_4, %c0_5] : memref<8x2x128xf32, #tpu.memory_space<vmem>>, vector<8x2x128xf32>
    %3 = vector.extract_strided_slice %2 {offsets = [0, 0, 0], sizes = [8, 1, 128], strides = [1, 1, 1]} : vector<8x2x128xf32> to vector<8x1x128xf32>
    %4 = vector.shape_cast %3 : vector<8x1x128xf32> to vector<8x128xf32>
    %cst = arith.constant dense<0.000000e+00> : vector<8x128xf32>
    %5 = tpu.matmul %4, %0, %cst {dimension_numbers = #tpu.dot_dimension_numbers<[1], [0], [0], [1], [0, 0, 1, 1], [], []>} : vector<8x128xf32>, vector<128x128xf32>, vector<8x128xf32> -> vector<8x128xf32>
    %6 = vector.broadcast %1 : vector<1x128xf32> to vector<8x128xf32>
    %7 = arith.addf %5, %6 : vector<8x128xf32>
    %c0_6 = arith.constant 0 : index
    %c0_7 = arith.constant 0 : index
    %c0_8 = arith.constant 0 : index
    %8 = vector.load %arg4[%c0_6, %c0_7, %c0_8] : memref<2x8x128xf32, #tpu.memory_space<vmem>>, vector<1x8x128xf32>
    %9 = vector.shape_cast %8 : vector<1x8x128xf32> to vector<8x128xf32>
    %10 = vector.shape_cast %7 : vector<8x128xf32> to vector<1x8x128xf32>
    tpu.vector_store %arg4[%c0_6, %c0_7, %c0_8], %10 {strides = array<i32>} : memref<2x8x128xf32, #tpu.memory_space<vmem>>, vector<1x8x128xf32>,
    %c0_9 = arith.constant 0 : index
    %c0_10 = arith.constant 0 : index
    %c0_11 = arith.constant 0 : index
    %11 = vector.load %arg5[%c0_9, %c0_10, %c0_11] : memref<2x8x128xf32, #tpu.memory_space<vmem>>, vector<1x8x128xf32>
    %12 = vector.shape_cast %11 : vector<1x8x128xf32> to vector<8x128xf32>
    %13 = vector.shape_cast %4 : vector<8x128xf32> to vector<1x8x128xf32>
    tpu.vector_store %arg5[%c0_9, %c0_10, %c0_11], %13 {strides = array<i32>} : memref<2x8x128xf32, #tpu.memory_space<vmem>>, vector<1x8x128xf32>,
    %14 = vector.extract_strided_slice %2 {offsets = [0, 1, 0], sizes = [8, 1, 128], strides = [1, 1, 1]} : vector<8x2x128xf32> to vector<8x1x128xf32>
    %15 = vector.shape_cast %14 : vector<8x1x128xf32> to vector<8x128xf32>
    %cst_12 = arith.constant dense<0.000000e+00> : vector<8x128xf32>
    %16 = tpu.matmul %15, %0, %cst_12 {dimension_numbers = #tpu.dot_dimension_numbers<[1], [0], [0], [1], [0, 0, 1, 1], [], []>} : vector<8x128xf32>, vector<128x128xf32>, vector<8x128xf32> -> vector<8x128xf32>
    %17 = vector.broadcast %1 : vector<1x128xf32> to vector<8x128xf32>
    %18 = arith.addf %16, %17 : vector<8x128xf32>
    %c1 = arith.constant 1 : index
    %c0_13 = arith.constant 0 : index
    %c0_14 = arith.constant 0 : index
    %19 = vector.load %arg4[%c1, %c0_13, %c0_14] : memref<2x8x128xf32, #tpu.memory_space<vmem>>, vector<1x8x128xf32>
    %20 = vector.shape_cast %19 : vector<1x8x128xf32> to vector<8x128xf32>
    %21 = vector.shape_cast %18 : vector<8x128xf32> to vector<1x8x128xf32>
    tpu.vector_store %arg4[%c1, %c0_13, %c0_14], %21 {strides = array<i32>} : memref<2x8x128xf32, #tpu.memory_space<vmem>>, vector<1x8x128xf32>,
    %c1_15 = arith.constant 1 : index
    %c0_16 = arith.constant 0 : index
    %c0_17 = arith.constant 0 : index
    %22 = vector.load %arg5[%c1_15, %c0_16, %c0_17] : memref<2x8x128xf32, #tpu.memory_space<vmem>>, vector<1x8x128xf32>
    %23 = vector.shape_cast %22 : vector<1x8x128xf32> to vector<8x128xf32>
    %24 = vector.shape_cast %15 : vector<8x128xf32> to vector<1x8x128xf32>
    tpu.vector_store %arg5[%c1_15, %c0_16, %c0_17], %24 {strides = array<i32>} : memref<2x8x128xf32, #tpu.memory_space<vmem>>, vector<1x8x128xf32>,
    return
  }
  func.func @transform_0(%arg0: i32) -> (i32, i32, i32) {
    %c0_i32 = arith.constant 0 : i32
    %c0_i32_0 = arith.constant 0 : i32
    %c0_i32_1 = arith.constant 0 : i32
    return %arg0, %c0_i32, %c0_i32_0 : i32, i32, i32
  }
  func.func @transform_1(%arg0: i32) -> (i32, i32) {
    %c0_i32 = arith.constant 0 : i32
    %c0_i32_0 = arith.constant 0 : i32
    %c0_i32_1 = arith.constant 0 : i32
    return %c0_i32, %c0_i32_0 : i32, i32
  }
  func.func @transform_2(%arg0: i32) -> (i32, i32) {
    %c0_i32 = arith.constant 0 : i32
    %c0_i32_0 = arith.constant 0 : i32
    %c0_i32_1 = arith.constant 0 : i32
    return %c0_i32, %c0_i32_0 : i32, i32
  }
  func.func @transform_3(%arg0: i32) -> (i32, i32, i32) {
    %c0_i32 = arith.constant 0 : i32
    %c0_i32_0 = arith.constant 0 : i32
    %c0_i32_1 = arith.constant 0 : i32
    return %c0_i32, %arg0, %c0_i32_0 : i32, i32, i32
  }
  func.func @transform_4(%arg0: i32) -> (i32, i32, i32) {
    %c0_i32 = arith.constant 0 : i32
    %c0_i32_0 = arith.constant 0 : i32
    %c0_i32_1 = arith.constant 0 : i32
    return %c0_i32, %arg0, %c0_i32_0 : i32, i32, i32
  }
}

</mosaic_0001>

<llo_original>
// kernel: rnn_forward.5
$region0: #{rnn_forward.5}
  #allocation0 [shape = 'u32[]', space=smem, size = 0x4, offset = 0x4, fixed_abs, tag = 'smem constant byte address 0x4 - core index']
  #allocation1 [shape = 'u32[144,128]{1,0:T(1,128)}', space=vmem, size = 0x12000, scoped, tag = 'internal scratch']
  %s0 = inlined_call_operand.vmem [shape: f32[8,2,128], index: 0, kind: input, shape index: {}]
  %s1 = inlined_call_operand.vmem [shape: f32[128,128], index: 1, kind: input, shape index: {}]
  %s2 = inlined_call_operand.vmem [shape: f32[1,128], index: 2, kind: input, shape index: {}]
  %s3 = inlined_call_operand.hbm [shape: f32[2,8,128], index: 3, kind: output, shape index: {0}]
  %s4 = inlined_call_operand.hbm [shape: f32[2,8,128], index: 4, kind: output, shape index: {1}]
  %5 = xla_tuple %s3, %s4
  %s6 = sld [smem:[#allocation0]]
  $region30: #{rnn_forward.5} parent=0
    _
  %s8 = ssub.s32 1, %s6
  %s9 = scalar_select 0, %s8, %s6
  $region1: #{rnn_forward.5} parent=0
    #allocation2 [shape = 'u8[8192]{0}', space=vmem, size = 0x2000, scoped, tag = 'output window, operand 0, single buffered']
    #allocation3 [shape = 's32[1]{0}', space=sflag, size = 0x4, scoped, tag = 'scoped memory for rnn_forward.5']
    #allocation4 [shape = 'u8[8192]{0}', space=vmem, size = 0x2000, scoped, tag = 'output window, operand 1, single buffered']
    #allocation5 [shape = 's32[1]{0}', space=sflag, size = 0x4, scoped, tag = 'scoped memory for rnn_forward.5']
    %10 = vsyncpa [#allocation3], 0
    %11 = vsyncpa [#allocation5], 0
    // Predicated region
    $region2: #{rnn_forward.5} parent=1 // pred_check
      _
    $region3: #{rnn_forward.5} parent=1 // pred_check_branch
      %13 = sbr.rel (0) target = $region5
    $region4: #{rnn_forward.5} parent=1 // pred_region
      _
    $region5: #{rnn_forward.5} parent=1 // pred_fallthru
      _
    // Predicated region
    $region6: #{rnn_forward.5} parent=1 // pred_check
      _
    $region7: #{rnn_forward.5} parent=1 // pred_check_branch
      %15 = sbr.rel (0) target = $region9
    $region8: #{rnn_forward.5} parent=1 // pred_region
      _
    $region9: #{rnn_forward.5} parent=1 // pred_fallthru
      _
    // Predicated region
    $region10: #{rnn_forward.5} parent=1 // pred_check
      _
    $region11: #{rnn_forward.5} parent=1 // pred_check_branch
      %17 = sbr.rel (0) target = $region13
    $region12: #{rnn_forward.5} parent=1 // pred_region
      _
    $region13: #{rnn_forward.5} parent=1 // pred_fallthru
      _
    %v18 = vld [vmem:[%s1] sm:$0xff]
    %v19 = vld [vmem:[%s1 + $0x8] sm:$0xff]
    %v20 = vld [vmem:[%s1 + $0x10] sm:$0xff]
    %v21 = vld [vmem:[%s1 + $0x18] sm:$0xff]
    %v22 = vld [vmem:[%s1 + $0x20] sm:$0xff]
    %v23 = vld [vmem:[%s1 + $0x28] sm:$0xff]
    %v24 = vld [vmem:[%s1 + $0x30] sm:$0xff]
    %v25 = vld [vmem:[%s1 + $0x38] sm:$0xff]
    %v26 = vld [vmem:[%s1 + $0x40] sm:$0xff]
    %v27 = vld [vmem:[%s1 + $0x48] sm:$0xff]
    %v28 = vld [vmem:[%s1 + $0x50] sm:$0xff]
    %v29 = vld [vmem:[%s1 + $0x58] sm:$0xff]
    %v30 = vld [vmem:[%s1 + $0x60] sm:$0xff]
    %v31 = vld [vmem:[%s1 + $0x68] sm:$0xff]
    %v32 = vld [vmem:[%s1 + $0x70] sm:$0xff]
    %v33 = vld [vmem:[%s1 + $0x78] sm:$0xff]
    %v34 = vld [vmem:[%s2] sm:$0x1]
    %v35 = vld [vmem:[%s0] sm:$0x3]
    %v36 = vld [vmem:[%s0 + $0x2] sm:$0x3]
    %v37 = vld [vmem:[%s0 + $0x4] sm:$0x3]
    %v38 = vld [vmem:[%s0 + $0x6] sm:$0x3]
    %v39 = vld [vmem:[%s0 + $0x8] sm:$0x3]
    %v40 = vld [vmem:[%s0 + $0xa] sm:$0x3]
    %v41 = vld [vmem:[%s0 + $0xc] sm:$0x3]
    %v42 = vld [vmem:[%s0 + $0xe] sm:$0x3]
    %v44 = vlaneseq
    %v45 = vshrl.u32 %v44, 7
    %v46 = vsub.s32 0, %v45
    %v47 = vrot.slane %v34, %v46
    %v57 = vrot.slane %v36, 7
    %vm58 = vcmask 1041409
    %v59 = vsel %vm58, %v57, %v35
    %v60 = vrot.slane %v37, 6
    %vm61 = vcmask 1042434
    %v62 = vsel %vm61, %v60, %v59
    %v63 = vrot.slane %v38, 5
    %vm64 = vcmask 1043459
    %v65 = vsel %vm64, %v63, %v62
    %v66 = vrot.slane %v39, 4
    %vm67 = vcmask 1044484
    %v68 = vsel %vm67, %v66, %v65
    %v69 = vrot.slane %v40, 3
    %vm70 = vcmask 1045509
    %v71 = vsel %vm70, %v69, %v68
    %v72 = vrot.slane %v41, 2
    %vm73 = vcmask 1046534
    %v74 = vsel %vm73, %v72, %v71
    %v75 = vrot.slane %v42, 1
    %vm76 = vcmask 1047559
    %v77 = vsel %vm76, %v75, %v74
    %79 = vmatprep.subr.mxu0 0.0
    %80 = vmatpush1.msra.mxu0 %v18
    %81 = vmatprep.subr.mxu0 0.0
    %82 = vmatpush1.msra.mxu0 %v19
    %83 = vmatprep.subr.mxu0 0.0
    %84 = vmatpush1.msra.mxu0 %v20
    %85 = vmatprep.subr.mxu0 0.0
    %86 = vmatpush1.msra.mxu0 %v21
    %87 = vmatprep.subr.mxu0 0.0
    %88 = vmatpush1.msra.mxu0 %v22
    %89 = vmatprep.subr.mxu0 0.0
    %90 = vmatpush1.msra.mxu0 %v23
    %91 = vmatprep.subr.mxu0 0.0
    %92 = vmatpush1.msra.mxu0 %v24
    %93 = vmatprep.subr.mxu0 0.0
    %94 = vmatpush1.msra.mxu0 %v25
    %95 = vmatprep.subr.mxu0 0.0
    %96 = vmatpush1.msra.mxu0 %v26
    %97 = vmatprep.subr.mxu0 0.0
    %98 = vmatpush1.msra.mxu0 %v27
    %99 = vmatprep.subr.mxu0 0.0
    %100 = vmatpush1.msra.mxu0 %v28
    %101 = vmatprep.subr.mxu0 0.0
    %102 = vmatpush1.msra.mxu0 %v29
    %103 = vmatprep.subr.mxu0 0.0
    %104 = vmatpush1.msra.mxu0 %v30
    %105 = vmatprep.subr.mxu0 0.0
    %106 = vmatpush1.msra.mxu0 %v31
    %107 = vmatprep.subr.mxu0 0.0
    %108 = vmatpush1.msra.mxu0 %v32
    %109 = vmatprep.subr.mxu0 0.0
    %110 = vmatpush1.msra.mxu0 %v33
    %111 = vmatprep.subr.mxu0 0.0
    %112 = vmatpush1.msra.mxu0 0.0
    %113 = vmatprep.subr.mxu0 0.0
    %114 = vmatpush1.msra.mxu0 0.0
    %115 = vmatprep.subr.mxu0 0.0
    %116 = vmatpush1.msra.mxu0 0.0
    %117 = vmatprep.subr.mxu0 0.0
    %118 = vmatpush1.msra.mxu0 0.0
    %119 = vmatprep.subr.mxu0 0.0
    %120 = vmatpush1.msra.mxu0 0.0
    %121 = vmatprep.subr.mxu0 0.0
    %122 = vmatpush1.msra.mxu0 0.0
    %123 = vmatprep.subr.mxu0 0.0
    %124 = vmatpush1.msra.mxu0 0.0
    %125 = vmatprep.subr.mxu0 0.0
    %126 = vmatpush1.msra.mxu0 0.0
    %127 = vmatprep.subr.mxu0 0.0
    %128 = vmatpush1.msra.mxu0 0.0
    %129 = vmatprep.subr.mxu0 0.0
    %130 = vmatpush1.msra.mxu0 0.0
    %131 = vmatprep.subr.mxu0 0.0
    %132 = vmatpush1.msra.mxu0 0.0
    %133 = vmatprep.subr.mxu0 0.0
    %134 = vmatpush1.msra.mxu0 0.0
    %135 = vmatprep.subr.mxu0 0.0
    %136 = vmatpush1.msra.mxu0 0.0
    %137 = vmatprep.subr.mxu0 0.0
    %138 = vmatpush1.msra.mxu0 0.0
    %139 = vmatprep.subr.mxu0 0.0
    %140 = vmatpush1.msra.mxu0 0.0
    %141 = vmatprep.subr.mxu0 0.0
    %142 = vmatpush1.msra.mxu0 0.0
    %143 = vmatprep.mubr.f32.mxu0 0.0
    %144 = vmatmul.mubr.f32.gmra.mrb[0].mxu0 %v77
    %v145 = vpop.f32.mrb[0].mxu0
    %v146 = vadd.f32 %v47, %v145
    %v147 = vpop.f32.mrb[0].mxu0
    %148 = vdwg.mxu0
    %149 = vst [vmem:[#allocation2] sm:$0xff] %v146
    %150 = vst [vmem:[#allocation4] sm:$0xff] %v77
    %v151 = vrot.slane %v35, 1
    %v152 = vsel %vm58, %v36, %v151
    %v153 = vrot.slane %v37, 7
    %v154 = vsel %vm61, %v153, %v152
    %v155 = vrot.slane %v38, 6
    %v156 = vsel %vm64, %v155, %v154
    %v157 = vrot.slane %v39, 5
    %v158 = vsel %vm67, %v157, %v156
    %v159 = vrot.slane %v40, 4
    %v160 = vsel %vm70, %v159, %v158
    %v161 = vrot.slane %v41, 3
    %v162 = vsel %vm73, %v161, %v160
    %v163 = vrot.slane %v42, 2
    %v164 = vsel %vm76, %v163, %v162
    %166 = vmatprep.subr.mxu0 0.0
    %167 = vmatpush1.msra.mxu0 %v18
    %168 = vmatprep.subr.mxu0 0.0
    %169 = vmatpush1.msra.mxu0 %v19
    %170 = vmatprep.subr.mxu0 0.0
    %171 = vmatpush1.msra.mxu0 %v20
    %172 = vmatprep.subr.mxu0 0.0
    %173 = vmatpush1.msra.mxu0 %v21
    %174 = vmatprep.subr.mxu0 0.0
    %175 = vmatpush1.msra.mxu0 %v22
    %176 = vmatprep.subr.mxu0 0.0
    %177 = vmatpush1.msra.mxu0 %v23
    %178 = vmatprep.subr.mxu0 0.0
    %179 = vmatpush1.msra.mxu0 %v24
    %180 = vmatprep.subr.mxu0 0.0
    %181 = vmatpush1.msra.mxu0 %v25
    %182 = vmatprep.subr.mxu0 0.0
    %183 = vmatpush1.msra.mxu0 %v26
    %184 = vmatprep.subr.mxu0 0.0
    %185 = vmatpush1.msra.mxu0 %v27
    %186 = vmatprep.subr.mxu0 0.0
    %187 = vmatpush1.msra.mxu0 %v28
    %188 = vmatprep.subr.mxu0 0.0
    %189 = vmatpush1.msra.mxu0 %v29
    %190 = vmatprep.subr.mxu0 0.0
    %191 = vmatpush1.msra.mxu0 %v30
    %192 = vmatprep.subr.mxu0 0.0
    %193 = vmatpush1.msra.mxu0 %v31
    %194 = vmatprep.subr.mxu0 0.0
    %195 = vmatpush1.msra.mxu0 %v32
    %196 = vmatprep.subr.mxu0 0.0
    %197 = vmatpush1.msra.mxu0 %v33
    %198 = vmatprep.subr.mxu0 0.0
    %199 = vmatpush1.msra.mxu0 0.0
    %200 = vmatprep.subr.mxu0 0.0
    %201 = vmatpush1.msra.mxu0 0.0
    %202 = vmatprep.subr.mxu0 0.0
    %203 = vmatpush1.msra.mxu0 0.0
    %204 = vmatprep.subr.mxu0 0.0
    %205 = vmatpush1.msra.mxu0 0.0
    %206 = vmatprep.subr.mxu0 0.0
    %207 = vmatpush1.msra.mxu0 0.0
    %208 = vmatprep.subr.mxu0 0.0
    %209 = vmatpush1.msra.mxu0 0.0
    %210 = vmatprep.subr.mxu0 0.0
    %211 = vmatpush1.msra.mxu0 0.0
    %212 = vmatprep.subr.mxu0 0.0
    %213 = vmatpush1.msra.mxu0 0.0
    %214 = vmatprep.subr.mxu0 0.0
    %215 = vmatpush1.msra.mxu0 0.0
    %216 = vmatprep.subr.mxu0 0.0
    %217 = vmatpush1.msra.mxu0 0.0
    %218 = vmatprep.subr.mxu0 0.0
    %219 = vmatpush1.msra.mxu0 0.0
    %220 = vmatprep.subr.mxu0 0.0
    %221 = vmatpush1.msra.mxu0 0.0
    %222 = vmatprep.subr.mxu0 0.0
    %223 = vmatpush1.msra.mxu0 0.0
    %224 = vmatprep.subr.mxu0 0.0
    %225 = vmatpush1.msra.mxu0 0.0
    %226 = vmatprep.subr.mxu0 0.0
    %227 = vmatpush1.msra.mxu0 0.0
    %228 = vmatprep.subr.mxu0 0.0
    %229 = vmatpush1.msra.mxu0 0.0
    %230 = vmatprep.mubr.f32.mxu0 0.0
    %231 = vmatmul.mubr.f32.gmra.mrb[0].mxu0 %v164
    %v232 = vpop.f32.mrb[0].mxu0
    %v233 = vadd.f32 %v47, %v232
    %v234 = vpop.f32.mrb[0].mxu0
    %235 = vdwg.mxu0
    %s236 = scalar_lea.vmem [#allocation2], 8
    %237 = vst [vmem:[%s236] sm:$0xff] %v233
    %v238 = vsel %vm61, %v57, %v35
    %v239 = vsel %vm64, %v60, %v238
    %v240 = vsel %vm67, %v63, %v239
    %v241 = vsel %vm70, %v66, %v240
    %v242 = vsel %vm73, %v69, %v241
    %v243 = vsel %vm76, %v72, %v242
    %s246 = scalar_lea.vmem [#allocation4], 8
    %247 = vst [vmem:[%s246 - $0x1] sm:$0xfe] %v243
    %248 = vst [vmem:[%s246 + $0x7] sm:$0x1] %v75
    // Predicated region
    $region14: #{rnn_forward.5} parent=1 // pred_check
      _
    $region15: #{rnn_forward.5} parent=1 // pred_check_branch
      %250 = sbr.rel (0) target = $region17
    $region16: #{rnn_forward.5} parent=1 // pred_region
      %s252 = ssub.s32 256, 256
      %253 = vsyncadd [#allocation3], %s252
      %s254 = sshll.u32 [#allocation2], 4
      %s255 = int_to_ptr.vmem [resolvable:$true] %s254
      %260 = dma.vmem_to_hbm [thread:$0]  %s255, 256, %s3, [#allocation3], 128, 128, 8
    $region17: #{rnn_forward.5} parent=1 // pred_fallthru
      _
    // Predicated region
    $region18: #{rnn_forward.5} parent=1 // pred_check
      _
    $region19: #{rnn_forward.5} parent=1 // pred_check_branch
      %262 = sbr.rel (0) target = $region21
    $region20: #{rnn_forward.5} parent=1 // pred_region
      %s264 = ssub.s32 256, 256
      %265 = vsyncadd [#allocation5], %s264
      %s266 = sshll.u32 [#allocation4], 4
      %s267 = int_to_ptr.vmem [resolvable:$true] %s266
      %272 = dma.vmem_to_hbm [thread:$0]  %s267, 256, %s4, [#allocation5], 128, 128, 8
    $region21: #{rnn_forward.5} parent=1 // pred_fallthru
      _
    // Predicated region
    $region22: #{rnn_forward.5} parent=1 // pred_check
      _
    $region23: #{rnn_forward.5} parent=1 // pred_check_branch
      %274 = sbr.rel (0) target = $region25
    $region24: #{rnn_forward.5} parent=1 // pred_region
      %275 = dma.done [#allocation3], 256
    $region25: #{rnn_forward.5} parent=1 // pred_fallthru
      _
    // Predicated region
    $region26: #{rnn_forward.5} parent=1 // pred_check
      _
    $region27: #{rnn_forward.5} parent=1 // pred_check_branch
      %277 = sbr.rel (0) target = $region29
    $region28: #{rnn_forward.5} parent=1 // pred_region
      %278 = dma.done [#allocation5], 256
    $region29: #{rnn_forward.5} parent=1 // pred_fallthru
      _
    %279 = vsyncpa [#allocation3], 1
    %280 = vsyncpa [#allocation5], 1

// kernel: rnn_forward.4
$region0: #{rnn_forward.4}
  #allocation0 [shape = 'u32[]', space=smem, size = 0x4, offset = 0x4, fixed_abs, tag = 'smem constant byte address 0x4 - core index']
  #allocation1 [shape = 'u32[144,128]{1,0:T(1,128)}', space=vmem, size = 0x12000, scoped, tag = 'internal scratch']
  #allocation2 [shape = 'f32[2,128]{1,0:T(2,128)}', space=vmem, size = 0x400, scoped, tag = 'scratch operand']
  %s0 = inlined_call_operand.vmem [shape: f32[16,128], index: 0, kind: input, shape index: {}]
  %s1 = inlined_call_operand.vmem [shape: f32[128,128], index: 1, kind: input, shape index: {}]
  %s2 = inlined_call_operand.vmem [shape: f32[1,128], index: 2, kind: input, shape index: {}]
  %s3 = inlined_call_operand.vmem [shape: f32[128,128], index: 3, kind: input, shape index: {}]
  %s4 = inlined_call_operand.vmem [shape: f32[16,128], index: 4, kind: output, shape index: {}]
  %s5 = sld [smem:[#allocation0]]
  $region26: #{rnn_forward.4} parent=0
    _
  %s7 = ssub.s32 1, %s5
  %s8 = scalar_select 0, %s7, %s5
  // Predicated region
  $region2: #{rnn_forward.4} parent=0 // pred_check
    _
  $region3: #{rnn_forward.4} parent=0 // pred_check_branch
    %10 = sbr.rel (0) target = $region5
  $region4: #{rnn_forward.4} parent=0 // pred_region
    _
  $region5: #{rnn_forward.4} parent=0 // pred_fallthru
    _
  // Predicated region
  $region6: #{rnn_forward.4} parent=0 // pred_check
    _
  $region7: #{rnn_forward.4} parent=0 // pred_check_branch
    %12 = sbr.rel (0) target = $region9
  $region8: #{rnn_forward.4} parent=0 // pred_region
    _
  $region9: #{rnn_forward.4} parent=0 // pred_fallthru
    _
  // Predicated region
  $region10: #{rnn_forward.4} parent=0 // pred_check
    _
  $region11: #{rnn_forward.4} parent=0 // pred_check_branch
    %14 = sbr.rel (0) target = $region13
  $region12: #{rnn_forward.4} parent=0 // pred_region
    _
  $region13: #{rnn_forward.4} parent=0 // pred_fallthru
    _
  // Predicated region
  $region14: #{rnn_forward.4} parent=0 // pred_check
    _
  $region15: #{rnn_forward.4} parent=0 // pred_check_branch
    %16 = sbr.rel (0) target = $region17
  $region16: #{rnn_forward.4} parent=0 // pred_region
    _
  $region17: #{rnn_forward.4} parent=0 // pred_fallthru
    _
  %v17 = vld [vmem:[%s0] sm:$0xff]
  %v18 = vld [vmem:[%s0 + $0x8] sm:$0xff]
  %v19 = vld [vmem:[%s1] sm:$0xff]
  %v20 = vld [vmem:[%s1 + $0x8] sm:$0xff]
  %v21 = vld [vmem:[%s1 + $0x10] sm:$0xff]
  %v22 = vld [vmem:[%s1 + $0x18] sm:$0xff]
  %v23 = vld [vmem:[%s1 + $0x20] sm:$0xff]
  %v24 = vld [vmem:[%s1 + $0x28] sm:$0xff]
  %v25 = vld [vmem:[%s1 + $0x30] sm:$0xff]
  %v26 = vld [vmem:[%s1 + $0x38] sm:$0xff]
  %v27 = vld [vmem:[%s1 + $0x40] sm:$0xff]
  %v28 = vld [vmem:[%s1 + $0x48] sm:$0xff]
  %v29 = vld [vmem:[%s1 + $0x50] sm:$0xff]
  %v30 = vld [vmem:[%s1 + $0x58] sm:$0xff]
  %v31 = vld [vmem:[%s1 + $0x60] sm:$0xff]
  %v32 = vld [vmem:[%s1 + $0x68] sm:$0xff]
  %v33 = vld [vmem:[%s1 + $0x70] sm:$0xff]
  %v34 = vld [vmem:[%s1 + $0x78] sm:$0xff]
  %v35 = vld [vmem:[%s2] sm:$0x1]
  %v37 = vlaneseq
  %v38 = vshrl.u32 %v37, 7
  %v39 = vsub.s32 0, %v38
  %v40 = vrot.slane %v35, %v39
  %42 = vmatprep.subr.mxu0 0.0
  %43 = vmatpush1.msra.mxu0 %v19
  %44 = vmatprep.subr.mxu0 0.0
  %45 = vmatpush1.msra.mxu0 %v20
  %46 = vmatprep.subr.mxu0 0.0
  %47 = vmatpush1.msra.mxu0 %v21
  %48 = vmatprep.subr.mxu0 0.0
  %49 = vmatpush1.msra.mxu0 %v22
  %50 = vmatprep.subr.mxu0 0.0
  %51 = vmatpush1.msra.mxu0 %v23
  %52 = vmatprep.subr.mxu0 0.0
  %53 = vmatpush1.msra.mxu0 %v24
  %54 = vmatprep.subr.mxu0 0.0
  %55 = vmatpush1.msra.mxu0 %v25
  %56 = vmatprep.subr.mxu0 0.0
  %57 = vmatpush1.msra.mxu0 %v26
  %58 = vmatprep.subr.mxu0 0.0
  %59 = vmatpush1.msra.mxu0 %v27
  %60 = vmatprep.subr.mxu0 0.0
  %61 = vmatpush1.msra.mxu0 %v28
  %62 = vmatprep.subr.mxu0 0.0
  %63 = vmatpush1.msra.mxu0 %v29
  %64 = vmatprep.subr.mxu0 0.0
  %65 = vmatpush1.msra.mxu0 %v30
  %66 = vmatprep.subr.mxu0 0.0
  %67 = vmatpush1.msra.mxu0 %v31
  %68 = vmatprep.subr.mxu0 0.0
  %69 = vmatpush1.msra.mxu0 %v32
  %70 = vmatprep.subr.mxu0 0.0
  %71 = vmatpush1.msra.mxu0 %v33
  %72 = vmatprep.subr.mxu0 0.0
  %73 = vmatpush1.msra.mxu0 %v34
  %74 = vmatprep.subr.mxu0 0.0
  %75 = vmatpush1.msra.mxu0 0.0
  %76 = vmatprep.subr.mxu0 0.0
  %77 = vmatpush1.msra.mxu0 0.0
  %78 = vmatprep.subr.mxu0 0.0
  %79 = vmatpush1.msra.mxu0 0.0
  %80 = vmatprep.subr.mxu0 0.0
  %81 = vmatpush1.msra.mxu0 0.0
  %82 = vmatprep.subr.mxu0 0.0
  %83 = vmatpush1.msra.mxu0 0.0
  %84 = vmatprep.subr.mxu0 0.0
  %85 = vmatpush1.msra.mxu0 0.0
  %86 = vmatprep.subr.mxu0 0.0
  %87 = vmatpush1.msra.mxu0 0.0
  %88 = vmatprep.subr.mxu0 0.0
  %89 = vmatpush1.msra.mxu0 0.0
  %90 = vmatprep.subr.mxu0 0.0
  %91 = vmatpush1.msra.mxu0 0.0
  %92 = vmatprep.subr.mxu0 0.0
  %93 = vmatpush1.msra.mxu0 0.0
  %94 = vmatprep.subr.mxu0 0.0
  %95 = vmatpush1.msra.mxu0 0.0
  %96 = vmatprep.subr.mxu0 0.0
  %97 = vmatpush1.msra.mxu0 0.0
  %98 = vmatprep.subr.mxu0 0.0
  %99 = vmatpush1.msra.mxu0 0.0
  %100 = vmatprep.subr.mxu0 0.0
  %101 = vmatpush1.msra.mxu0 0.0
  %102 = vmatprep.subr.mxu0 0.0
  %103 = vmatpush1.msra.mxu0 0.0
  %104 = vmatprep.subr.mxu0 0.0
  %105 = vmatpush1.msra.mxu0 0.0
  %106 = vmatprep.mubr.f32.mxu0 0.0
  %107 = vmatmul.mubr.f32.gmra.mrb[0].mxu0 %v17
  %v108 = vpop.f32.mrb[0].mxu0
  %v109 = vadd.f32 %v40, %v108
  %v110 = vpop.f32.mrb[0].mxu0
  %111 = vmatprep.mubr.f32.mxu0 0.0
  %112 = vmatmul.mubr.f32.gmra.mrb[0].mxu0 %v18
  %v113 = vpop.f32.mrb[0].mxu0
  %v114 = vadd.f32 %v40, %v113
  %v115 = vpop.f32.mrb[0].mxu0
  %116 = vdwg.mxu0
  %117 = vst [vmem:[%s4] sm:$0xff] %v109
  %118 = vst [vmem:[%s4 + $0x8] sm:$0xff] %v114
  %v119 = vld [vmem:[%s3] sm:$0xff]
  %v120 = vld [vmem:[%s3 + $0x8] sm:$0xff]
  %v121 = vld [vmem:[%s3 + $0x10] sm:$0xff]
  %v122 = vld [vmem:[%s3 + $0x18] sm:$0xff]
  %v123 = vld [vmem:[%s3 + $0x20] sm:$0xff]
  %v124 = vld [vmem:[%s3 + $0x28] sm:$0xff]
  %v125 = vld [vmem:[%s3 + $0x30] sm:$0xff]
  %v126 = vld [vmem:[%s3 + $0x38] sm:$0xff]
  %v127 = vld [vmem:[%s3 + $0x40] sm:$0xff]
  %v128 = vld [vmem:[%s3 + $0x48] sm:$0xff]
  %v129 = vld [vmem:[%s3 + $0x50] sm:$0xff]
  %v130 = vld [vmem:[%s3 + $0x58] sm:$0xff]
  %v131 = vld [vmem:[%s3 + $0x60] sm:$0xff]
  %v132 = vld [vmem:[%s3 + $0x68] sm:$0xff]
  %v133 = vld [vmem:[%s3 + $0x70] sm:$0xff]
  %v134 = vld [vmem:[%s3 + $0x78] sm:$0xff]
  %v135 = vld [vmem:[#allocation2] sm:$0x3]
  %p136 = scmp.eq.s32.totalorder 0, 0
  %s137 = scalar_select %p136, 1, 0
  %v138 = vstv %s137
  %vm139 = vcmp.eq.s32.totalorder %v138, 1
  %v140 = vsel %vm139, 0.0, %v135
  %v141 = vld [vmem:[%s4] sm:$0x3]
  %142 = vmatprep.subr.mxu0 0.0
  %143 = vmatpush1.msra.mxu0 %v119
  %144 = vmatprep.subr.mxu0 0.0
  %145 = vmatpush1.msra.mxu0 %v120
  %146 = vmatprep.subr.mxu0 0.0
  %147 = vmatpush1.msra.mxu0 %v121
  %148 = vmatprep.subr.mxu0 0.0
  %149 = vmatpush1.msra.mxu0 %v122
  %150 = vmatprep.subr.mxu0 0.0
  %151 = vmatpush1.msra.mxu0 %v123
  %152 = vmatprep.subr.mxu0 0.0
  %153 = vmatpush1.msra.mxu0 %v124
  %154 = vmatprep.subr.mxu0 0.0
  %155 = vmatpush1.msra.mxu0 %v125
  %156 = vmatprep.subr.mxu0 0.0
  %157 = vmatpush1.msra.mxu0 %v126
  %158 = vmatprep.subr.mxu0 0.0
  %159 = vmatpush1.msra.mxu0 %v127
  %160 = vmatprep.subr.mxu0 0.0
  %161 = vmatpush1.msra.mxu0 %v128
  %162 = vmatprep.subr.mxu0 0.0
  %163 = vmatpush1.msra.mxu0 %v129
  %164 = vmatprep.subr.mxu0 0.0
  %165 = vmatpush1.msra.mxu0 %v130
  %166 = vmatprep.subr.mxu0 0.0
  %167 = vmatpush1.msra.mxu0 %v131
  %168 = vmatprep.subr.mxu0 0.0
  %169 = vmatpush1.msra.mxu0 %v132
  %170 = vmatprep.subr.mxu0 0.0
  %171 = vmatpush1.msra.mxu0 %v133
  %172 = vmatprep.subr.mxu0 0.0
  %173 = vmatpush1.msra.mxu0 %v134
  %174 = vmatprep.subr.mxu0 0.0
  %175 = vmatpush1.msra.mxu0 0.0
  %176 = vmatprep.subr.mxu0 0.0
  %177 = vmatpush1.msra.mxu0 0.0
  %178 = vmatprep.subr.mxu0 0.0
  %179 = vmatpush1.msra.mxu0 0.0
  %180 = vmatprep.subr.mxu0 0.0
  %181 = vmatpush1.msra.mxu0 0.0
  %182 = vmatprep.subr.mxu0 0.0
  %183 = vmatpush1.msra.mxu0 0.0
  %184 = vmatprep.subr.mxu0 0.0
  %185 = vmatpush1.msra.mxu0 0.0
  %186 = vmatprep.subr.mxu0 0.0
  %187 = vmatpush1.msra.mxu0 0.0
  %188 = vmatprep.subr.mxu0 0.0
  %189 = vmatpush1.msra.mxu0 0.0
  %190 = vmatprep.subr.mxu0 0.0
  %191 = vmatpush1.msra.mxu0 0.0
  %192 = vmatprep.subr.mxu0 0.0
  %193 = vmatpush1.msra.mxu0 0.0
  %194 = vmatprep.subr.mxu0 0.0
  %195 = vmatpush1.msra.mxu0 0.0
  %196 = vmatprep.subr.mxu0 0.0
  %197 = vmatpush1.msra.mxu0 0.0
  %198 = vmatprep.subr.mxu0 0.0
  %199 = vmatpush1.msra.mxu0 0.0
  %200 = vmatprep.subr.mxu0 0.0
  %201 = vmatpush1.msra.mxu0 0.0
  %202 = vmatprep.subr.mxu0 0.0
  %203 = vmatpush1.msra.mxu0 0.0
  %204 = vmatprep.subr.mxu0 0.0
  %205 = vmatpush1.msra.mxu0 0.0
  %206 = vmatprep.mubr.f32.mxu0 0.0
  %207 = vmatmul.mubr.f32.gmra.mrb[0].mxu0 %v140
  %v208 = vpop.f32.mrb[0].mxu0
  %v209 = vadd.f32 0.0, %v208
  %v210 = vpop.f32.mrb[0].mxu0
  %211 = vdwg.mxu0
  %v212 = vadd.f32 %v141, %v209
  %v213 = vtanh.pop %v212
  %214 = vst [vmem:[%s4] sm:$0x3] %v213
  %s215 = scalar_lea.vmem %s4, 2
  %v216 = vld [vmem:[%s215] sm:$0x3]
  %217 = vmatprep.subr.mxu0 0.0
  %218 = vmatpush1.msra.mxu0 %v119
  %219 = vmatprep.subr.mxu0 0.0
  %220 = vmatpush1.msra.mxu0 %v120
  %221 = vmatprep.subr.mxu0 0.0
  %222 = vmatpush1.msra.mxu0 %v121
  %223 = vmatprep.subr.mxu0 0.0
  %224 = vmatpush1.msra.mxu0 %v122
  %225 = vmatprep.subr.mxu0 0.0
  %226 = vmatpush1.msra.mxu0 %v123
  %227 = vmatprep.subr.mxu0 0.0
  %228 = vmatpush1.msra.mxu0 %v124
  %229 = vmatprep.subr.mxu0 0.0
  %230 = vmatpush1.msra.mxu0 %v125
  %231 = vmatprep.subr.mxu0 0.0
  %232 = vmatpush1.msra.mxu0 %v126
  %233 = vmatprep.subr.mxu0 0.0
  %234 = vmatpush1.msra.mxu0 %v127
  %235 = vmatprep.subr.mxu0 0.0
  %236 = vmatpush1.msra.mxu0 %v128
  %237 = vmatprep.subr.mxu0 0.0
  %238 = vmatpush1.msra.mxu0 %v129
  %239 = vmatprep.subr.mxu0 0.0
  %240 = vmatpush1.msra.mxu0 %v130
  %241 = vmatprep.subr.mxu0 0.0
  %242 = vmatpush1.msra.mxu0 %v131
  %243 = vmatprep.subr.mxu0 0.0
  %244 = vmatpush1.msra.mxu0 %v132
  %245 = vmatprep.subr.mxu0 0.0
  %246 = vmatpush1.msra.mxu0 %v133
  %247 = vmatprep.subr.mxu0 0.0
  %248 = vmatpush1.msra.mxu0 %v134
  %249 = vmatprep.subr.mxu0 0.0
  %250 = vmatpush1.msra.mxu0 0.0
  %251 = vmatprep.subr.mxu0 0.0
  %252 = vmatpush1.msra.mxu0 0.0
  %253 = vmatprep.subr.mxu0 0.0
  %254 = vmatpush1.msra.mxu0 0.0
  %255 = vmatprep.subr.mxu0 0.0
  %256 = vmatpush1.msra.mxu0 0.0
  %257 = vmatprep.subr.mxu0 0.0
  %258 = vmatpush1.msra.mxu0 0.0
  %259 = vmatprep.subr.mxu0 0.0
  %260 = vmatpush1.msra.mxu0 0.0
  %261 = vmatprep.subr.mxu0 0.0
  %262 = vmatpush1.msra.mxu0 0.0
  %263 = vmatprep.subr.mxu0 0.0
  %264 = vmatpush1.msra.mxu0 0.0
  %265 = vmatprep.subr.mxu0 0.0
  %266 = vmatpush1.msra.mxu0 0.0
  %267 = vmatprep.subr.mxu0 0.0
  %268 = vmatpush1.msra.mxu0 0.0
  %269 = vmatprep.subr.mxu0 0.0
  %270 = vmatpush1.msra.mxu0 0.0
  %271 = vmatprep.subr.mxu0 0.0
  %272 = vmatpush1.msra.mxu0 0.0
  %273 = vmatprep.subr.mxu0 0.0
  %274 = vmatpush1.msra.mxu0 0.0
  %275 = vmatprep.subr.mxu0 0.0
  %276 = vmatpush1.msra.mxu0 0.0
  %277 = vmatprep.subr.mxu0 0.0
  %278 = vmatpush1.msra.mxu0 0.0
  %279 = vmatprep.subr.mxu0 0.0
  %280 = vmatpush1.msra.mxu0 0.0
  %281 = vmatprep.mubr.f32.mxu0 0.0
  %282 = vmatmul.mubr.f32.gmra.mrb[0].mxu0 %v213
  %v283 = vpop.f32.mrb[0].mxu0
  %v284 = vadd.f32 0.0, %v283
  %v285 = vpop.f32.mrb[0].mxu0
  %286 = vdwg.mxu0
  %v287 = vadd.f32 %v216, %v284
  %v288 = vtanh.pop %v287
  %289 = vst [vmem:[%s215] sm:$0x3] %v288
  %s290 = scalar_lea.vmem %s4, 4
  %v291 = vld [vmem:[%s290] sm:$0x3]
  %292 = vmatprep.subr.mxu0 0.0
  %293 = vmatpush1.msra.mxu0 %v119
  %294 = vmatprep.subr.mxu0 0.0
  %295 = vmatpush1.msra.mxu0 %v120
  %296 = vmatprep.subr.mxu0 0.0
  %297 = vmatpush1.msra.mxu0 %v121
  %298 = vmatprep.subr.mxu0 0.0
  %299 = vmatpush1.msra.mxu0 %v122
  %300 = vmatprep.subr.mxu0 0.0
  %301 = vmatpush1.msra.mxu0 %v123
  %302 = vmatprep.subr.mxu0 0.0
  %303 = vmatpush1.msra.mxu0 %v124
  %304 = vmatprep.subr.mxu0 0.0
  %305 = vmatpush1.msra.mxu0 %v125
  %306 = vmatprep.subr.mxu0 0.0
  %307 = vmatpush1.msra.mxu0 %v126
  %308 = vmatprep.subr.mxu0 0.0
  %309 = vmatpush1.msra.mxu0 %v127
  %310 = vmatprep.subr.mxu0 0.0
  %311 = vmatpush1.msra.mxu0 %v128
  %312 = vmatprep.subr.mxu0 0.0
  %313 = vmatpush1.msra.mxu0 %v129
  %314 = vmatprep.subr.mxu0 0.0
  %315 = vmatpush1.msra.mxu0 %v130
  %316 = vmatprep.subr.mxu0 0.0
  %317 = vmatpush1.msra.mxu0 %v131
  %318 = vmatprep.subr.mxu0 0.0
  %319 = vmatpush1.msra.mxu0 %v132
  %320 = vmatprep.subr.mxu0 0.0
  %321 = vmatpush1.msra.mxu0 %v133
  %322 = vmatprep.subr.mxu0 0.0
  %323 = vmatpush1.msra.mxu0 %v134
  %324 = vmatprep.subr.mxu0 0.0
  %325 = vmatpush1.msra.mxu0 0.0
  %326 = vmatprep.subr.mxu0 0.0
  %327 = vmatpush1.msra.mxu0 0.0
  %328 = vmatprep.subr.mxu0 0.0
  %329 = vmatpush1.msra.mxu0 0.0
  %330 = vmatprep.subr.mxu0 0.0
  %331 = vmatpush1.msra.mxu0 0.0
  %332 = vmatprep.subr.mxu0 0.0
  %333 = vmatpush1.msra.mxu0 0.0
  %334 = vmatprep.subr.mxu0 0.0
  %335 = vmatpush1.msra.mxu0 0.0
  %336 = vmatprep.subr.mxu0 0.0
  %337 = vmatpush1.msra.mxu0 0.0
  %338 = vmatprep.subr.mxu0 0.0
  %339 = vmatpush1.msra.mxu0 0.0
  %340 = vmatprep.subr.mxu0 0.0
  %341 = vmatpush1.msra.mxu0 0.0
  %342 = vmatprep.subr.mxu0 0.0
  %343 = vmatpush1.msra.mxu0 0.0
  %344 = vmatprep.subr.mxu0 0.0
  %345 = vmatpush1.msra.mxu0 0.0
  %346 = vmatprep.subr.mxu0 0.0
  %347 = vmatpush1.msra.mxu0 0.0
  %348 = vmatprep.subr.mxu0 0.0
  %349 = vmatpush1.msra.mxu0 0.0
  %350 = vmatprep.subr.mxu0 0.0
  %351 = vmatpush1.msra.mxu0 0.0
  %352 = vmatprep.subr.mxu0 0.0
  %353 = vmatpush1.msra.mxu0 0.0
  %354 = vmatprep.subr.mxu0 0.0
  %355 = vmatpush1.msra.mxu0 0.0
  %356 = vmatprep.mubr.f32.mxu0 0.0
  %357 = vmatmul.mubr.f32.gmra.mrb[0].mxu0 %v288
  %v358 = vpop.f32.mrb[0].mxu0
  %v359 = vadd.f32 0.0, %v358
  %v360 = vpop.f32.mrb[0].mxu0
  %361 = vdwg.mxu0
  %v362 = vadd.f32 %v291, %v359
  %v363 = vtanh.pop %v362
  %364 = vst [vmem:[%s290] sm:$0x3] %v363
  %s365 = scalar_lea.vmem %s4, 6
  %v366 = vld [vmem:[%s365] sm:$0x3]
  %367 = vmatprep.subr.mxu0 0.0
  %368 = vmatpush1.msra.mxu0 %v119
  %369 = vmatprep.subr.mxu0 0.0
  %370 = vmatpush1.msra.mxu0 %v120
  %371 = vmatprep.subr.mxu0 0.0
  %372 = vmatpush1.msra.mxu0 %v121
  %373 = vmatprep.subr.mxu0 0.0
  %374 = vmatpush1.msra.mxu0 %v122
  %375 = vmatprep.subr.mxu0 0.0
  %376 = vmatpush1.msra.mxu0 %v123
  %377 = vmatprep.subr.mxu0 0.0
  %378 = vmatpush1.msra.mxu0 %v124
  %379 = vmatprep.subr.mxu0 0.0
  %380 = vmatpush1.msra.mxu0 %v125
  %381 = vmatprep.subr.mxu0 0.0
  %382 = vmatpush1.msra.mxu0 %v126
  %383 = vmatprep.subr.mxu0 0.0
  %384 = vmatpush1.msra.mxu0 %v127
  %385 = vmatprep.subr.mxu0 0.0
  %386 = vmatpush1.msra.mxu0 %v128
  %387 = vmatprep.subr.mxu0 0.0
  %388 = vmatpush1.msra.mxu0 %v129
  %389 = vmatprep.subr.mxu0 0.0
  %390 = vmatpush1.msra.mxu0 %v130
  %391 = vmatprep.subr.mxu0 0.0
  %392 = vmatpush1.msra.mxu0 %v131
  %393 = vmatprep.subr.mxu0 0.0
  %394 = vmatpush1.msra.mxu0 %v132
  %395 = vmatprep.subr.mxu0 0.0
  %396 = vmatpush1.msra.mxu0 %v133
  %397 = vmatprep.subr.mxu0 0.0
  %398 = vmatpush1.msra.mxu0 %v134
  %399 = vmatprep.subr.mxu0 0.0
  %400 = vmatpush1.msra.mxu0 0.0
  %401 = vmatprep.subr.mxu0 0.0
  %402 = vmatpush1.msra.mxu0 0.0
  %403 = vmatprep.subr.mxu0 0.0
  %404 = vmatpush1.msra.mxu0 0.0
  %405 = vmatprep.subr.mxu0 0.0
  %406 = vmatpush1.msra.mxu0 0.0
  %407 = vmatprep.subr.mxu0 0.0
  %408 = vmatpush1.msra.mxu0 0.0
  %409 = vmatprep.subr.mxu0 0.0
  %410 = vmatpush1.msra.mxu0 0.0
  %411 = vmatprep.subr.mxu0 0.0
  %412 = vmatpush1.msra.mxu0 0.0
  %413 = vmatprep.subr.mxu0 0.0
  %414 = vmatpush1.msra.mxu0 0.0
  %415 = vmatprep.subr.mxu0 0.0
  %416 = vmatpush1.msra.mxu0 0.0
  %417 = vmatprep.subr.mxu0 0.0
  %418 = vmatpush1.msra.mxu0 0.0
  %419 = vmatprep.subr.mxu0 0.0
  %420 = vmatpush1.msra.mxu0 0.0
  %421 = vmatprep.subr.mxu0 0.0
  %422 = vmatpush1.msra.mxu0 0.0
  %423 = vmatprep.subr.mxu0 0.0
  %424 = vmatpush1.msra.mxu0 0.0
  %425 = vmatprep.subr.mxu0 0.0
  %426 = vmatpush1.msra.mxu0 0.0
  %427 = vmatprep.subr.mxu0 0.0
  %428 = vmatpush1.msra.mxu0 0.0
  %429 = vmatprep.subr.mxu0 0.0
  %430 = vmatpush1.msra.mxu0 0.0
  %431 = vmatprep.mubr.f32.mxu0 0.0
  %432 = vmatmul.mubr.f32.gmra.mrb[0].mxu0 %v363
  %v433 = vpop.f32.mrb[0].mxu0
  %v434 = vadd.f32 0.0, %v433
  %v435 = vpop.f32.mrb[0].mxu0
  %436 = vdwg.mxu0
  %v437 = vadd.f32 %v366, %v434
  %v438 = vtanh.pop %v437
  %439 = vst [vmem:[%s365] sm:$0x3] %v438
  %s440 = scalar_lea.vmem %s4, 8
  %v441 = vld [vmem:[%s440] sm:$0x3]
  %442 = vmatprep.subr.mxu0 0.0
  %443 = vmatpush1.msra.mxu0 %v119
  %444 = vmatprep.subr.mxu0 0.0
  %445 = vmatpush1.msra.mxu0 %v120
  %446 = vmatprep.subr.mxu0 0.0
  %447 = vmatpush1.msra.mxu0 %v121
  %448 = vmatprep.subr.mxu0 0.0
  %449 = vmatpush1.msra.mxu0 %v122
  %450 = vmatprep.subr.mxu0 0.0
  %451 = vmatpush1.msra.mxu0 %v123
  %452 = vmatprep.subr.mxu0 0.0
  %453 = vmatpush1.msra.mxu0 %v124
  %454 = vmatprep.subr.mxu0 0.0
  %455 = vmatpush1.msra.mxu0 %v125
  %456 = vmatprep.subr.mxu0 0.0
  %457 = vmatpush1.msra.mxu0 %v126
  %458 = vmatprep.subr.mxu0 0.0
  %459 = vmatpush1.msra.mxu0 %v127
  %460 = vmatprep.subr.mxu0 0.0
  %461 = vmatpush1.msra.mxu0 %v128
  %462 = vmatprep.subr.mxu0 0.0
  %463 = vmatpush1.msra.mxu0 %v129
  %464 = vmatprep.subr.mxu0 0.0
  %465 = vmatpush1.msra.mxu0 %v130
  %466 = vmatprep.subr.mxu0 0.0
  %467 = vmatpush1.msra.mxu0 %v131
  %468 = vmatprep.subr.mxu0 0.0
  %469 = vmatpush1.msra.mxu0 %v132
  %470 = vmatprep.subr.mxu0 0.0
  %471 = vmatpush1.msra.mxu0 %v133
  %472 = vmatprep.subr.mxu0 0.0
  %473 = vmatpush1.msra.mxu0 %v134
  %474 = vmatprep.subr.mxu0 0.0
  %475 = vmatpush1.msra.mxu0 0.0
  %476 = vmatprep.subr.mxu0 0.0
  %477 = vmatpush1.msra.mxu0 0.0
  %478 = vmatprep.subr.mxu0 0.0
  %479 = vmatpush1.msra.mxu0 0.0
  %480 = vmatprep.subr.mxu0 0.0
  %481 = vmatpush1.msra.mxu0 0.0
  %482 = vmatprep.subr.mxu0 0.0
  %483 = vmatpush1.msra.mxu0 0.0
  %484 = vmatprep.subr.mxu0 0.0
  %485 = vmatpush1.msra.mxu0 0.0
  %486 = vmatprep.subr.mxu0 0.0
  %487 = vmatpush1.msra.mxu0 0.0
  %488 = vmatprep.subr.mxu0 0.0
  %489 = vmatpush1.msra.mxu0 0.0
  %490 = vmatprep.subr.mxu0 0.0
  %491 = vmatpush1.msra.mxu0 0.0
  %492 = vmatprep.subr.mxu0 0.0
  %493 = vmatpush1.msra.mxu0 0.0
  %494 = vmatprep.subr.mxu0 0.0
  %495 = vmatpush1.msra.mxu0 0.0
  %496 = vmatprep.subr.mxu0 0.0
  %497 = vmatpush1.msra.mxu0 0.0
  %498 = vmatprep.subr.mxu0 0.0
  %499 = vmatpush1.msra.mxu0 0.0
  %500 = vmatprep.subr.mxu0 0.0
  %501 = vmatpush1.msra.mxu0 0.0
  %502 = vmatprep.subr.mxu0 0.0
  %503 = vmatpush1.msra.mxu0 0.0
  %504 = vmatprep.subr.mxu0 0.0
  %505 = vmatpush1.msra.mxu0 0.0
  %506 = vmatprep.mubr.f32.mxu0 0.0
  %507 = vmatmul.mubr.f32.gmra.mrb[0].mxu0 %v438
  %v508 = vpop.f32.mrb[0].mxu0
  %v509 = vadd.f32 0.0, %v508
  %v510 = vpop.f32.mrb[0].mxu0
  %511 = vdwg.mxu0
  %v512 = vadd.f32 %v441, %v509
  %v513 = vtanh.pop %v512
  %514 = vst [vmem:[%s440] sm:$0x3] %v513
  %s515 = scalar_lea.vmem %s4, 10
  %v516 = vld [vmem:[%s515] sm:$0x3]
  %517 = vmatprep.subr.mxu0 0.0
  %518 = vmatpush1.msra.mxu0 %v119
  %519 = vmatprep.subr.mxu0 0.0
  %520 = vmatpush1.msra.mxu0 %v120
  %521 = vmatprep.subr.mxu0 0.0
  %522 = vmatpush1.msra.mxu0 %v121
  %523 = vmatprep.subr.mxu0 0.0
  %524 = vmatpush1.msra.mxu0 %v122
  %525 = vmatprep.subr.mxu0 0.0
  %526 = vmatpush1.msra.mxu0 %v123
  %527 = vmatprep.subr.mxu0 0.0
  %528 = vmatpush1.msra.mxu0 %v124
  %529 = vmatprep.subr.mxu0 0.0
  %530 = vmatpush1.msra.mxu0 %v125
  %531 = vmatprep.subr.mxu0 0.0
  %532 = vmatpush1.msra.mxu0 %v126
  %533 = vmatprep.subr.mxu0 0.0
  %534 = vmatpush1.msra.mxu0 %v127
  %535 = vmatprep.subr.mxu0 0.0
  %536 = vmatpush1.msra.mxu0 %v128
  %537 = vmatprep.subr.mxu0 0.0
  %538 = vmatpush1.msra.mxu0 %v129
  %539 = vmatprep.subr.mxu0 0.0
  %540 = vmatpush1.msra.mxu0 %v130
  %541 = vmatprep.subr.mxu0 0.0
  %542 = vmatpush1.msra.mxu0 %v131
  %543 = vmatprep.subr.mxu0 0.0
  %544 = vmatpush1.msra.mxu0 %v132
  %545 = vmatprep.subr.mxu0 0.0
  %546 = vmatpush1.msra.mxu0 %v133
  %547 = vmatprep.subr.mxu0 0.0
  %548 = vmatpush1.msra.mxu0 %v134
  %549 = vmatprep.subr.mxu0 0.0
  %550 = vmatpush1.msra.mxu0 0.0
  %551 = vmatprep.subr.mxu0 0.0
  %552 = vmatpush1.msra.mxu0 0.0
  %553 = vmatprep.subr.mxu0 0.0
  %554 = vmatpush1.msra.mxu0 0.0
  %555 = vmatprep.subr.mxu0 0.0
  %556 = vmatpush1.msra.mxu0 0.0
  %557 = vmatprep.subr.mxu0 0.0
  %558 = vmatpush1.msra.mxu0 0.0
  %559 = vmatprep.subr.mxu0 0.0
  %560 = vmatpush1.msra.mxu0 0.0
  %561 = vmatprep.subr.mxu0 0.0
  %562 = vmatpush1.msra.mxu0 0.0
  %563 = vmatprep.subr.mxu0 0.0
  %564 = vmatpush1.msra.mxu0 0.0
  %565 = vmatprep.subr.mxu0 0.0
  %566 = vmatpush1.msra.mxu0 0.0
  %567 = vmatprep.subr.mxu0 0.0
  %568 = vmatpush1.msra.mxu0 0.0
  %569 = vmatprep.subr.mxu0 0.0
  %570 = vmatpush1.msra.mxu0 0.0
  %571 = vmatprep.subr.mxu0 0.0
  %572 = vmatpush1.msra.mxu0 0.0
  %573 = vmatprep.subr.mxu0 0.0
  %574 = vmatpush1.msra.mxu0 0.0
  %575 = vmatprep.subr.mxu0 0.0
  %576 = vmatpush1.msra.mxu0 0.0
  %577 = vmatprep.subr.mxu0 0.0
  %578 = vmatpush1.msra.mxu0 0.0
  %579 = vmatprep.subr.mxu0 0.0
  %580 = vmatpush1.msra.mxu0 0.0
  %581 = vmatprep.mubr.f32.mxu0 0.0
  %582 = vmatmul.mubr.f32.gmra.mrb[0].mxu0 %v513
  %v583 = vpop.f32.mrb[0].mxu0
  %v584 = vadd.f32 0.0, %v583
  %v585 = vpop.f32.mrb[0].mxu0
  %586 = vdwg.mxu0
  %v587 = vadd.f32 %v516, %v584
  %v588 = vtanh.pop %v587
  %589 = vst [vmem:[%s515] sm:$0x3] %v588
  %s590 = scalar_lea.vmem %s4, 12
  %v591 = vld [vmem:[%s590] sm:$0x3]
  %592 = vmatprep.subr.mxu0 0.0
  %593 = vmatpush1.msra.mxu0 %v119
  %594 = vmatprep.subr.mxu0 0.0
  %595 = vmatpush1.msra.mxu0 %v120
  %596 = vmatprep.subr.mxu0 0.0
  %597 = vmatpush1.msra.mxu0 %v121
  %598 = vmatprep.subr.mxu0 0.0
  %599 = vmatpush1.msra.mxu0 %v122
  %600 = vmatprep.subr.mxu0 0.0
  %601 = vmatpush1.msra.mxu0 %v123
  %602 = vmatprep.subr.mxu0 0.0
  %603 = vmatpush1.msra.mxu0 %v124
  %604 = vmatprep.subr.mxu0 0.0
  %605 = vmatpush1.msra.mxu0 %v125
  %606 = vmatprep.subr.mxu0 0.0
  %607 = vmatpush1.msra.mxu0 %v126
  %608 = vmatprep.subr.mxu0 0.0
  %609 = vmatpush1.msra.mxu0 %v127
  %610 = vmatprep.subr.mxu0 0.0
  %611 = vmatpush1.msra.mxu0 %v128
  %612 = vmatprep.subr.mxu0 0.0
  %613 = vmatpush1.msra.mxu0 %v129
  %614 = vmatprep.subr.mxu0 0.0
  %615 = vmatpush1.msra.mxu0 %v130
  %616 = vmatprep.subr.mxu0 0.0
  %617 = vmatpush1.msra.mxu0 %v131
  %618 = vmatprep.subr.mxu0 0.0
  %619 = vmatpush1.msra.mxu0 %v132
  %620 = vmatprep.subr.mxu0 0.0
  %621 = vmatpush1.msra.mxu0 %v133
  %622 = vmatprep.subr.mxu0 0.0
  %623 = vmatpush1.msra.mxu0 %v134
  %624 = vmatprep.subr.mxu0 0.0
  %625 = vmatpush1.msra.mxu0 0.0
  %626 = vmatprep.subr.mxu0 0.0
  %627 = vmatpush1.msra.mxu0 0.0
  %628 = vmatprep.subr.mxu0 0.0
  %629 = vmatpush1.msra.mxu0 0.0
  %630 = vmatprep.subr.mxu0 0.0
  %631 = vmatpush1.msra.mxu0 0.0
  %632 = vmatprep.subr.mxu0 0.0
  %633 = vmatpush1.msra.mxu0 0.0
  %634 = vmatprep.subr.mxu0 0.0
  %635 = vmatpush1.msra.mxu0 0.0
  %636 = vmatprep.subr.mxu0 0.0
  %637 = vmatpush1.msra.mxu0 0.0
  %638 = vmatprep.subr.mxu0 0.0
  %639 = vmatpush1.msra.mxu0 0.0
  %640 = vmatprep.subr.mxu0 0.0
  %641 = vmatpush1.msra.mxu0 0.0
  %642 = vmatprep.subr.mxu0 0.0
  %643 = vmatpush1.msra.mxu0 0.0
  %644 = vmatprep.subr.mxu0 0.0
  %645 = vmatpush1.msra.mxu0 0.0
  %646 = vmatprep.subr.mxu0 0.0
  %647 = vmatpush1.msra.mxu0 0.0
  %648 = vmatprep.subr.mxu0 0.0
  %649 = vmatpush1.msra.mxu0 0.0
  %650 = vmatprep.subr.mxu0 0.0
  %651 = vmatpush1.msra.mxu0 0.0
  %652 = vmatprep.subr.mxu0 0.0
  %653 = vmatpush1.msra.mxu0 0.0
  %654 = vmatprep.subr.mxu0 0.0
  %655 = vmatpush1.msra.mxu0 0.0
  %656 = vmatprep.mubr.f32.mxu0 0.0
  %657 = vmatmul.mubr.f32.gmra.mrb[0].mxu0 %v588
  %v658 = vpop.f32.mrb[0].mxu0
  %v659 = vadd.f32 0.0, %v658
  %v660 = vpop.f32.mrb[0].mxu0
  %661 = vdwg.mxu0
  %v662 = vadd.f32 %v591, %v659
  %v663 = vtanh.pop %v662
  %664 = vst [vmem:[%s590] sm:$0x3] %v663
  %s665 = scalar_lea.vmem %s4, 14
  %v666 = vld [vmem:[%s665] sm:$0x3]
  %667 = vmatprep.subr.mxu0 0.0
  %668 = vmatpush1.msra.mxu0 %v119
  %669 = vmatprep.subr.mxu0 0.0
  %670 = vmatpush1.msra.mxu0 %v120
  %671 = vmatprep.subr.mxu0 0.0
  %672 = vmatpush1.msra.mxu0 %v121
  %673 = vmatprep.subr.mxu0 0.0
  %674 = vmatpush1.msra.mxu0 %v122
  %675 = vmatprep.subr.mxu0 0.0
  %676 = vmatpush1.msra.mxu0 %v123
  %677 = vmatprep.subr.mxu0 0.0
  %678 = vmatpush1.msra.mxu0 %v124
  %679 = vmatprep.subr.mxu0 0.0
  %680 = vmatpush1.msra.mxu0 %v125
  %681 = vmatprep.subr.mxu0 0.0
  %682 = vmatpush1.msra.mxu0 %v126
  %683 = vmatprep.subr.mxu0 0.0
  %684 = vmatpush1.msra.mxu0 %v127
  %685 = vmatprep.subr.mxu0 0.0
  %686 = vmatpush1.msra.mxu0 %v128
  %687 = vmatprep.subr.mxu0 0.0
  %688 = vmatpush1.msra.mxu0 %v129
  %689 = vmatprep.subr.mxu0 0.0
  %690 = vmatpush1.msra.mxu0 %v130
  %691 = vmatprep.subr.mxu0 0.0
  %692 = vmatpush1.msra.mxu0 %v131
  %693 = vmatprep.subr.mxu0 0.0
  %694 = vmatpush1.msra.mxu0 %v132
  %695 = vmatprep.subr.mxu0 0.0
  %696 = vmatpush1.msra.mxu0 %v133
  %697 = vmatprep.subr.mxu0 0.0
  %698 = vmatpush1.msra.mxu0 %v134
  %699 = vmatprep.subr.mxu0 0.0
  %700 = vmatpush1.msra.mxu0 0.0
  %701 = vmatprep.subr.mxu0 0.0
  %702 = vmatpush1.msra.mxu0 0.0
  %703 = vmatprep.subr.mxu0 0.0
  %704 = vmatpush1.msra.mxu0 0.0
  %705 = vmatprep.subr.mxu0 0.0
  %706 = vmatpush1.msra.mxu0 0.0
  %707 = vmatprep.subr.mxu0 0.0
  %708 = vmatpush1.msra.mxu0 0.0
  %709 = vmatprep.subr.mxu0 0.0
  %710 = vmatpush1.msra.mxu0 0.0
  %711 = vmatprep.subr.mxu0 0.0
  %712 = vmatpush1.msra.mxu0 0.0
  %713 = vmatprep.subr.mxu0 0.0
  %714 = vmatpush1.msra.mxu0 0.0
  %715 = vmatprep.subr.mxu0 0.0
  %716 = vmatpush1.msra.mxu0 0.0
  %717 = vmatprep.subr.mxu0 0.0
  %718 = vmatpush1.msra.mxu0 0.0
  %719 = vmatprep.subr.mxu0 0.0
  %720 = vmatpush1.msra.mxu0 0.0
  %721 = vmatprep.subr.mxu0 0.0
  %722 = vmatpush1.msra.mxu0 0.0
  %723 = vmatprep.subr.mxu0 0.0
  %724 = vmatpush1.msra.mxu0 0.0
  %725 = vmatprep.subr.mxu0 0.0
  %726 = vmatpush1.msra.mxu0 0.0
  %727 = vmatprep.subr.mxu0 0.0
  %728 = vmatpush1.msra.mxu0 0.0
  %729 = vmatprep.subr.mxu0 0.0
  %730 = vmatpush1.msra.mxu0 0.0
  %731 = vmatprep.mubr.f32.mxu0 0.0
  %732 = vmatmul.mubr.f32.gmra.mrb[0].mxu0 %v663
  %v733 = vpop.f32.mrb[0].mxu0
  %v734 = vadd.f32 0.0, %v733
  %v735 = vpop.f32.mrb[0].mxu0
  %736 = vdwg.mxu0
  %v737 = vadd.f32 %v666, %v734
  %v738 = vtanh.pop %v737
  %739 = vst [vmem:[%s665] sm:$0x3] %v738
  %740 = vst [vmem:[#allocation2] sm:$0x3] %v738
  // Predicated region
  $region18: #{rnn_forward.4} parent=0 // pred_check
    _
  $region19: #{rnn_forward.4} parent=0 // pred_check_branch
    %742 = sbr.rel (0) target = $region21
  $region20: #{rnn_forward.4} parent=0 // pred_region
    _
  $region21: #{rnn_forward.4} parent=0 // pred_fallthru
    _
  // Predicated region
  $region22: #{rnn_forward.4} parent=0 // pred_check
    _
  $region23: #{rnn_forward.4} parent=0 // pred_check_branch
    %744 = sbr.rel (0) target = $region25
  $region24: #{rnn_forward.4} parent=0 // pred_region
    _
  $region25: #{rnn_forward.4} parent=0 // pred_fallthru
    _

// kernel: rnn_forward.3
$region0: #{rnn_forward.3}
  #allocation0 [shape = 'u32[]', space=smem, size = 0x4, offset = 0x4, fixed_abs, tag = 'smem constant byte address 0x4 - core index']
  #allocation1 [shape = 'u32[144,128]{1,0:T(1,128)}', space=vmem, size = 0x12000, scoped, tag = 'internal scratch']
  #allocation2 [shape = 'f32[2,128]{1,0:T(2,128)}', space=vmem, size = 0x400, scoped, tag = 'scratch operand']
  %s0 = inlined_call_operand.vmem [shape: f32[16,32], index: 0, kind: input, shape index: {}]
  %s1 = inlined_call_operand.vmem [shape: f32[32,128], index: 1, kind: input, shape index: {}]
  %s2 = inlined_call_operand.vmem [shape: f32[1,128], index: 2, kind: input, shape index: {}]
  %s3 = inlined_call_operand.vmem [shape: f32[128,128], index: 3, kind: input, shape index: {}]
  %s4 = inlined_call_operand.vmem [shape: f32[16,128], index: 4, kind: output, shape index: {}]
  %s5 = sld [smem:[#allocation0]]
  $region26: #{rnn_forward.3} parent=0
    _
  %s7 = ssub.s32 1, %s5
  %s8 = scalar_select 0, %s7, %s5
  // Predicated region
  $region2: #{rnn_forward.3} parent=0 // pred_check
    _
  $region3: #{rnn_forward.3} parent=0 // pred_check_branch
    %10 = sbr.rel (0) target = $region5
  $region4: #{rnn_forward.3} parent=0 // pred_region
    _
  $region5: #{rnn_forward.3} parent=0 // pred_fallthru
    _
  // Predicated region
  $region6: #{rnn_forward.3} parent=0 // pred_check
    _
  $region7: #{rnn_forward.3} parent=0 // pred_check_branch
    %12 = sbr.rel (0) target = $region9
  $region8: #{rnn_forward.3} parent=0 // pred_region
    _
  $region9: #{rnn_forward.3} parent=0 // pred_fallthru
    _
  // Predicated region
  $region10: #{rnn_forward.3} parent=0 // pred_check
    _
  $region11: #{rnn_forward.3} parent=0 // pred_check_branch
    %14 = sbr.rel (0) target = $region13
  $region12: #{rnn_forward.3} parent=0 // pred_region
    _
  $region13: #{rnn_forward.3} parent=0 // pred_fallthru
    _
  // Predicated region
  $region14: #{rnn_forward.3} parent=0 // pred_check
    _
  $region15: #{rnn_forward.3} parent=0 // pred_check_branch
    %16 = sbr.rel (0) target = $region17
  $region16: #{rnn_forward.3} parent=0 // pred_region
    _
  $region17: #{rnn_forward.3} parent=0 // pred_fallthru
    _
  %v17 = vld [vmem:[%s0] sm:$0xff]
  %v18 = vld [vmem:[%s0 + $0x8] sm:$0xff]
  %v19 = vld [vmem:[%s1] sm:$0xff]
  %v20 = vld [vmem:[%s1 + $0x8] sm:$0xff]
  %v21 = vld [vmem:[%s1 + $0x10] sm:$0xff]
  %v22 = vld [vmem:[%s1 + $0x18] sm:$0xff]
  %v23 = vld [vmem:[%s2] sm:$0x1]
  %v25 = vlaneseq
  %v26 = vshrl.u32 %v25, 7
  %v27 = vsub.s32 0, %v26
  %v28 = vrot.slane %v23, %v27
  %vm30 = vcmask 261120
  %v32 = vsel %vm30, %v17, 0
  %v35 = vsel %vm30, %v18, 0
  %37 = vmatprep.subr.mxu0 0.0
  %38 = vmatpush1.msra.mxu0 %v19
  %39 = vmatprep.subr.mxu0 0.0
  %40 = vmatpush1.msra.mxu0 %v20
  %41 = vmatprep.subr.mxu0 0.0
  %42 = vmatpush1.msra.mxu0 %v21
  %43 = vmatprep.subr.mxu0 0.0
  %44 = vmatpush1.msra.mxu0 %v22
  %45 = vmatprep.subr.mxu0 0.0
  %46 = vmatpush1.msra.mxu0 0.0
  %47 = vmatprep.subr.mxu0 0.0
  %48 = vmatpush1.msra.mxu0 0.0
  %49 = vmatprep.subr.mxu0 0.0
  %50 = vmatpush1.msra.mxu0 0.0
  %51 = vmatprep.subr.mxu0 0.0
  %52 = vmatpush1.msra.mxu0 0.0
  %53 = vmatprep.subr.mxu0 0.0
  %54 = vmatpush1.msra.mxu0 0.0
  %55 = vmatprep.subr.mxu0 0.0
  %56 = vmatpush1.msra.mxu0 0.0
  %57 = vmatprep.subr.mxu0 0.0
  %58 = vmatpush1.msra.mxu0 0.0
  %59 = vmatprep.subr.mxu0 0.0
  %60 = vmatpush1.msra.mxu0 0.0
  %61 = vmatprep.subr.mxu0 0.0
  %62 = vmatpush1.msra.mxu0 0.0
  %63 = vmatprep.subr.mxu0 0.0
  %64 = vmatpush1.msra.mxu0 0.0
  %65 = vmatprep.subr.mxu0 0.0
  %66 = vmatpush1.msra.mxu0 0.0
  %67 = vmatprep.subr.mxu0 0.0
  %68 = vmatpush1.msra.mxu0 0.0
  %69 = vmatprep.subr.mxu0 0.0
  %70 = vmatpush1.msra.mxu0 0.0
  %71 = vmatprep.subr.mxu0 0.0
  %72 = vmatpush1.msra.mxu0 0.0
  %73 = vmatprep.subr.mxu0 0.0
  %74 = vmatpush1.msra.mxu0 0.0
  %75 = vmatprep.subr.mxu0 0.0
  %76 = vmatpush1.msra.mxu0 0.0
  %77 = vmatprep.subr.mxu0 0.0
  %78 = vmatpush1.msra.mxu0 0.0
  %79 = vmatprep.subr.mxu0 0.0
  %80 = vmatpush1.msra.mxu0 0.0
  %81 = vmatprep.subr.mxu0 0.0
  %82 = vmatpush1.msra.mxu0 0.0
  %83 = vmatprep.subr.mxu0 0.0
  %84 = vmatpush1.msra.mxu0 0.0
  %85 = vmatprep.subr.mxu0 0.0
  %86 = vmatpush1.msra.mxu0 0.0
  %87 = vmatprep.subr.mxu0 0.0
  %88 = vmatpush1.msra.mxu0 0.0
  %89 = vmatprep.subr.mxu0 0.0
  %90 = vmatpush1.msra.mxu0 0.0
  %91 = vmatprep.subr.mxu0 0.0
  %92 = vmatpush1.msra.mxu0 0.0
  %93 = vmatprep.subr.mxu0 0.0
  %94 = vmatpush1.msra.mxu0 0.0
  %95 = vmatprep.subr.mxu0 0.0
  %96 = vmatpush1.msra.mxu0 0.0
  %97 = vmatprep.subr.mxu0 0.0
  %98 = vmatpush1.msra.mxu0 0.0
  %99 = vmatprep.subr.mxu0 0.0
  %100 = vmatpush1.msra.mxu0 0.0
  %101 = vmatprep.mubr.f32.mxu0 0.0
  %102 = vmatmul.mubr.f32.gmra.mrb[0].mxu0 %v32
  %v103 = vpop.f32.mrb[0].mxu0
  %v104 = vadd.f32 %v28, %v103
  %v105 = vpop.f32.mrb[0].mxu0
  %106 = vmatprep.mubr.f32.mxu0 0.0
  %107 = vmatmul.mubr.f32.gmra.mrb[0].mxu0 %v35
  %v108 = vpop.f32.mrb[0].mxu0
  %v109 = vadd.f32 %v28, %v108
  %v110 = vpop.f32.mrb[0].mxu0
  %111 = vdwg.mxu0
  %112 = vst [vmem:[%s4] sm:$0xff] %v104
  %113 = vst [vmem:[%s4 + $0x8] sm:$0xff] %v109
  %v114 = vld [vmem:[%s3] sm:$0xff]
  %v115 = vld [vmem:[%s3 + $0x8] sm:$0xff]
  %v116 = vld [vmem:[%s3 + $0x10] sm:$0xff]
  %v117 = vld [vmem:[%s3 + $0x18] sm:$0xff]
  %v118 = vld [vmem:[%s3 + $0x20] sm:$0xff]
  %v119 = vld [vmem:[%s3 + $0x28] sm:$0xff]
  %v120 = vld [vmem:[%s3 + $0x30] sm:$0xff]
  %v121 = vld [vmem:[%s3 + $0x38] sm:$0xff]
  %v122 = vld [vmem:[%s3 + $0x40] sm:$0xff]
  %v123 = vld [vmem:[%s3 + $0x48] sm:$0xff]
  %v124 = vld [vmem:[%s3 + $0x50] sm:$0xff]
  %v125 = vld [vmem:[%s3 + $0x58] sm:$0xff]
  %v126 = vld [vmem:[%s3 + $0x60] sm:$0xff]
  %v127 = vld [vmem:[%s3 + $0x68] sm:$0xff]
  %v128 = vld [vmem:[%s3 + $0x70] sm:$0xff]
  %v129 = vld [vmem:[%s3 + $0x78] sm:$0xff]
  %v130 = vld [vmem:[#allocation2] sm:$0x3]
  %p131 = scmp.eq.s32.totalorder 0, 0
  %s132 = scalar_select %p131, 1, 0
  %v133 = vstv %s132
  %vm134 = vcmp.eq.s32.totalorder %v133, 1
  %v135 = vsel %vm134, 0.0, %v130
  %v136 = vld [vmem:[%s4] sm:$0x3]
  %137 = vmatprep.subr.mxu0 0.0
  %138 = vmatpush1.msra.mxu0 %v114
  %139 = vmatprep.subr.mxu0 0.0
  %140 = vmatpush1.msra.mxu0 %v115
  %141 = vmatprep.subr.mxu0 0.0
  %142 = vmatpush1.msra.mxu0 %v116
  %143 = vmatprep.subr.mxu0 0.0
  %144 = vmatpush1.msra.mxu0 %v117
  %145 = vmatprep.subr.mxu0 0.0
  %146 = vmatpush1.msra.mxu0 %v118
  %147 = vmatprep.subr.mxu0 0.0
  %148 = vmatpush1.msra.mxu0 %v119
  %149 = vmatprep.subr.mxu0 0.0
  %150 = vmatpush1.msra.mxu0 %v120
  %151 = vmatprep.subr.mxu0 0.0
  %152 = vmatpush1.msra.mxu0 %v121
  %153 = vmatprep.subr.mxu0 0.0
  %154 = vmatpush1.msra.mxu0 %v122
  %155 = vmatprep.subr.mxu0 0.0
  %156 = vmatpush1.msra.mxu0 %v123
  %157 = vmatprep.subr.mxu0 0.0
  %158 = vmatpush1.msra.mxu0 %v124
  %159 = vmatprep.subr.mxu0 0.0
  %160 = vmatpush1.msra.mxu0 %v125
  %161 = vmatprep.subr.mxu0 0.0
  %162 = vmatpush1.msra.mxu0 %v126
  %163 = vmatprep.subr.mxu0 0.0
  %164 = vmatpush1.msra.mxu0 %v127
  %165 = vmatprep.subr.mxu0 0.0
  %166 = vmatpush1.msra.mxu0 %v128
  %167 = vmatprep.subr.mxu0 0.0
  %168 = vmatpush1.msra.mxu0 %v129
  %169 = vmatprep.subr.mxu0 0.0
  %170 = vmatpush1.msra.mxu0 0.0
  %171 = vmatprep.subr.mxu0 0.0
  %172 = vmatpush1.msra.mxu0 0.0
  %173 = vmatprep.subr.mxu0 0.0
  %174 = vmatpush1.msra.mxu0 0.0
  %175 = vmatprep.subr.mxu0 0.0
  %176 = vmatpush1.msra.mxu0 0.0
  %177 = vmatprep.subr.mxu0 0.0
  %178 = vmatpush1.msra.mxu0 0.0
  %179 = vmatprep.subr.mxu0 0.0
  %180 = vmatpush1.msra.mxu0 0.0
  %181 = vmatprep.subr.mxu0 0.0
  %182 = vmatpush1.msra.mxu0 0.0
  %183 = vmatprep.subr.mxu0 0.0
  %184 = vmatpush1.msra.mxu0 0.0
  %185 = vmatprep.subr.mxu0 0.0
  %186 = vmatpush1.msra.mxu0 0.0
  %187 = vmatprep.subr.mxu0 0.0
  %188 = vmatpush1.msra.mxu0 0.0
  %189 = vmatprep.subr.mxu0 0.0
  %190 = vmatpush1.msra.mxu0 0.0
  %191 = vmatprep.subr.mxu0 0.0
  %192 = vmatpush1.msra.mxu0 0.0
  %193 = vmatprep.subr.mxu0 0.0
  %194 = vmatpush1.msra.mxu0 0.0
  %195 = vmatprep.subr.mxu0 0.0
  %196 = vmatpush1.msra.mxu0 0.0
  %197 = vmatprep.subr.mxu0 0.0
  %198 = vmatpush1.msra.mxu0 0.0
  %199 = vmatprep.subr.mxu0 0.0
  %200 = vmatpush1.msra.mxu0 0.0
  %201 = vmatprep.mubr.f32.mxu0 0.0
  %202 = vmatmul.mubr.f32.gmra.mrb[0].mxu0 %v135
  %v203 = vpop.f32.mrb[0].mxu0
  %v204 = vadd.f32 0.0, %v203
  %v205 = vpop.f32.mrb[0].mxu0
  %206 = vdwg.mxu0
  %v207 = vadd.f32 %v136, %v204
  %v208 = vtanh.pop %v207
  %209 = vst [vmem:[%s4] sm:$0x3] %v208
  %s210 = scalar_lea.vmem %s4, 2
  %v211 = vld [vmem:[%s210] sm:$0x3]
  %212 = vmatprep.subr.mxu0 0.0
  %213 = vmatpush1.msra.mxu0 %v114
  %214 = vmatprep.subr.mxu0 0.0
  %215 = vmatpush1.msra.mxu0 %v115
  %216 = vmatprep.subr.mxu0 0.0
  %217 = vmatpush1.msra.mxu0 %v116
  %218 = vmatprep.subr.mxu0 0.0
  %219 = vmatpush1.msra.mxu0 %v117
  %220 = vmatprep.subr.mxu0 0.0
  %221 = vmatpush1.msra.mxu0 %v118
  %222 = vmatprep.subr.mxu0 0.0
  %223 = vmatpush1.msra.mxu0 %v119
  %224 = vmatprep.subr.mxu0 0.0
  %225 = vmatpush1.msra.mxu0 %v120
  %226 = vmatprep.subr.mxu0 0.0
  %227 = vmatpush1.msra.mxu0 %v121
  %228 = vmatprep.subr.mxu0 0.0
  %229 = vmatpush1.msra.mxu0 %v122
  %230 = vmatprep.subr.mxu0 0.0
  %231 = vmatpush1.msra.mxu0 %v123
  %232 = vmatprep.subr.mxu0 0.0
  %233 = vmatpush1.msra.mxu0 %v124
  %234 = vmatprep.subr.mxu0 0.0
  %235 = vmatpush1.msra.mxu0 %v125
  %236 = vmatprep.subr.mxu0 0.0
  %237 = vmatpush1.msra.mxu0 %v126
  %238 = vmatprep.subr.mxu0 0.0
  %239 = vmatpush1.msra.mxu0 %v127
  %240 = vmatprep.subr.mxu0 0.0
  %241 = vmatpush1.msra.mxu0 %v128
  %242 = vmatprep.subr.mxu0 0.0
  %243 = vmatpush1.msra.mxu0 %v129
  %244 = vmatprep.subr.mxu0 0.0
  %245 = vmatpush1.msra.mxu0 0.0
  %246 = vmatprep.subr.mxu0 0.0
  %247 = vmatpush1.msra.mxu0 0.0
  %248 = vmatprep.subr.mxu0 0.0
  %249 = vmatpush1.msra.mxu0 0.0
  %250 = vmatprep.subr.mxu0 0.0
  %251 = vmatpush1.msra.mxu0 0.0
  %252 = vmatprep.subr.mxu0 0.0
  %253 = vmatpush1.msra.mxu0 0.0
  %254 = vmatprep.subr.mxu0 0.0
  %255 = vmatpush1.msra.mxu0 0.0
  %256 = vmatprep.subr.mxu0 0.0
  %257 = vmatpush1.msra.mxu0 0.0
  %258 = vmatprep.subr.mxu0 0.0
  %259 = vmatpush1.msra.mxu0 0.0
  %260 = vmatprep.subr.mxu0 0.0
  %261 = vmatpush1.msra.mxu0 0.0
  %262 = vmatprep.subr.mxu0 0.0
  %263 = vmatpush1.msra.mxu0 0.0
  %264 = vmatprep.subr.mxu0 0.0
  %265 = vmatpush1.msra.mxu0 0.0
  %266 = vmatprep.subr.mxu0 0.0
  %267 = vmatpush1.msra.mxu0 0.0
  %268 = vmatprep.subr.mxu0 0.0
  %269 = vmatpush1.msra.mxu0 0.0
  %270 = vmatprep.subr.mxu0 0.0
  %271 = vmatpush1.msra.mxu0 0.0
  %272 = vmatprep.subr.mxu0 0.0
  %273 = vmatpush1.msra.mxu0 0.0
  %274 = vmatprep.subr.mxu0 0.0
  %275 = vmatpush1.msra.mxu0 0.0
  %276 = vmatprep.mubr.f32.mxu0 0.0
  %277 = vmatmul.mubr.f32.gmra.mrb[0].mxu0 %v208
  %v278 = vpop.f32.mrb[0].mxu0
  %v279 = vadd.f32 0.0, %v278
  %v280 = vpop.f32.mrb[0].mxu0
  %281 = vdwg.mxu0
  %v282 = vadd.f32 %v211, %v279
  %v283 = vtanh.pop %v282
  %284 = vst [vmem:[%s210] sm:$0x3] %v283
  %s285 = scalar_lea.vmem %s4, 4
  %v286 = vld [vmem:[%s285] sm:$0x3]
  %287 = vmatprep.subr.mxu0 0.0
  %288 = vmatpush1.msra.mxu0 %v114
  %289 = vmatprep.subr.mxu0 0.0
  %290 = vmatpush1.msra.mxu0 %v115
  %291 = vmatprep.subr.mxu0 0.0
  %292 = vmatpush1.msra.mxu0 %v116
  %293 = vmatprep.subr.mxu0 0.0
  %294 = vmatpush1.msra.mxu0 %v117
  %295 = vmatprep.subr.mxu0 0.0
  %296 = vmatpush1.msra.mxu0 %v118
  %297 = vmatprep.subr.mxu0 0.0
  %298 = vmatpush1.msra.mxu0 %v119
  %299 = vmatprep.subr.mxu0 0.0
  %300 = vmatpush1.msra.mxu0 %v120
  %301 = vmatprep.subr.mxu0 0.0
  %302 = vmatpush1.msra.mxu0 %v121
  %303 = vmatprep.subr.mxu0 0.0
  %304 = vmatpush1.msra.mxu0 %v122
  %305 = vmatprep.subr.mxu0 0.0
  %306 = vmatpush1.msra.mxu0 %v123
  %307 = vmatprep.subr.mxu0 0.0
  %308 = vmatpush1.msra.mxu0 %v124
  %309 = vmatprep.subr.mxu0 0.0
  %310 = vmatpush1.msra.mxu0 %v125
  %311 = vmatprep.subr.mxu0 0.0
  %312 = vmatpush1.msra.mxu0 %v126
  %313 = vmatprep.subr.mxu0 0.0
  %314 = vmatpush1.msra.mxu0 %v127
  %315 = vmatprep.subr.mxu0 0.0
  %316 = vmatpush1.msra.mxu0 %v128
  %317 = vmatprep.subr.mxu0 0.0
  %318 = vmatpush1.msra.mxu0 %v129
  %319 = vmatprep.subr.mxu0 0.0
  %320 = vmatpush1.msra.mxu0 0.0
  %321 = vmatprep.subr.mxu0 0.0
  %322 = vmatpush1.msra.mxu0 0.0
  %323 = vmatprep.subr.mxu0 0.0
  %324 = vmatpush1.msra.mxu0 0.0
  %325 = vmatprep.subr.mxu0 0.0
  %326 = vmatpush1.msra.mxu0 0.0
  %327 = vmatprep.subr.mxu0 0.0
  %328 = vmatpush1.msra.mxu0 0.0
  %329 = vmatprep.subr.mxu0 0.0
  %330 = vmatpush1.msra.mxu0 0.0
  %331 = vmatprep.subr.mxu0 0.0
  %332 = vmatpush1.msra.mxu0 0.0
  %333 = vmatprep.subr.mxu0 0.0
  %334 = vmatpush1.msra.mxu0 0.0
  %335 = vmatprep.subr.mxu0 0.0
  %336 = vmatpush1.msra.mxu0 0.0
  %337 = vmatprep.subr.mxu0 0.0
  %338 = vmatpush1.msra.mxu0 0.0
  %339 = vmatprep.subr.mxu0 0.0
  %340 = vmatpush1.msra.mxu0 0.0
  %341 = vmatprep.subr.mxu0 0.0
  %342 = vmatpush1.msra.mxu0 0.0
  %343 = vmatprep.subr.mxu0 0.0
  %344 = vmatpush1.msra.mxu0 0.0
  %345 = vmatprep.subr.mxu0 0.0
  %346 = vmatpush1.msra.mxu0 0.0
  %347 = vmatprep.subr.mxu0 0.0
  %348 = vmatpush1.msra.mxu0 0.0
  %349 = vmatprep.subr.mxu0 0.0
  %350 = vmatpush1.msra.mxu0 0.0
  %351 = vmatprep.mubr.f32.mxu0 0.0
  %352 = vmatmul.mubr.f32.gmra.mrb[0].mxu0 %v283
  %v353 = vpop.f32.mrb[0].mxu0
  %v354 = vadd.f32 0.0, %v353
  %v355 = vpop.f32.mrb[0].mxu0
  %356 = vdwg.mxu0
  %v357 = vadd.f32 %v286, %v354
  %v358 = vtanh.pop %v357
  %359 = vst [vmem:[%s285] sm:$0x3] %v358
  %s360 = scalar_lea.vmem %s4, 6
  %v361 = vld [vmem:[%s360] sm:$0x3]
  %362 = vmatprep.subr.mxu0 0.0
  %363 = vmatpush1.msra.mxu0 %v114
  %364 = vmatprep.subr.mxu0 0.0
  %365 = vmatpush1.msra.mxu0 %v115
  %366 = vmatprep.subr.mxu0 0.0
  %367 = vmatpush1.msra.mxu0 %v116
  %368 = vmatprep.subr.mxu0 0.0
  %369 = vmatpush1.msra.mxu0 %v117
  %370 = vmatprep.subr.mxu0 0.0
  %371 = vmatpush1.msra.mxu0 %v118
  %372 = vmatprep.subr.mxu0 0.0
  %373 = vmatpush1.msra.mxu0 %v119
  %374 = vmatprep.subr.mxu0 0.0
  %375 = vmatpush1.msra.mxu0 %v120
  %376 = vmatprep.subr.mxu0 0.0
  %377 = vmatpush1.msra.mxu0 %v121
  %378 = vmatprep.subr.mxu0 0.0
  %379 = vmatpush1.msra.mxu0 %v122
  %380 = vmatprep.subr.mxu0 0.0
  %381 = vmatpush1.msra.mxu0 %v123
  %382 = vmatprep.subr.mxu0 0.0
  %383 = vmatpush1.msra.mxu0 %v124
  %384 = vmatprep.subr.mxu0 0.0
  %385 = vmatpush1.msra.mxu0 %v125
  %386 = vmatprep.subr.mxu0 0.0
  %387 = vmatpush1.msra.mxu0 %v126
  %388 = vmatprep.subr.mxu0 0.0
  %389 = vmatpush1.msra.mxu0 %v127
  %390 = vmatprep.subr.mxu0 0.0
  %391 = vmatpush1.msra.mxu0 %v128
  %392 = vmatprep.subr.mxu0 0.0
  %393 = vmatpush1.msra.mxu0 %v129
  %394 = vmatprep.subr.mxu0 0.0
  %395 = vmatpush1.msra.mxu0 0.0
  %396 = vmatprep.subr.mxu0 0.0
  %397 = vmatpush1.msra.mxu0 0.0
  %398 = vmatprep.subr.mxu0 0.0
  %399 = vmatpush1.msra.mxu0 0.0
  %400 = vmatprep.subr.mxu0 0.0
  %401 = vmatpush1.msra.mxu0 0.0
  %402 = vmatprep.subr.mxu0 0.0
  %403 = vmatpush1.msra.mxu0 0.0
  %404 = vmatprep.subr.mxu0 0.0
  %405 = vmatpush1.msra.mxu0 0.0
  %406 = vmatprep.subr.mxu0 0.0
  %407 = vmatpush1.msra.mxu0 0.0
  %408 = vmatprep.subr.mxu0 0.0
  %409 = vmatpush1.msra.mxu0 0.0
  %410 = vmatprep.subr.mxu0 0.0
  %411 = vmatpush1.msra.mxu0 0.0
  %412 = vmatprep.subr.mxu0 0.0
  %413 = vmatpush1.msra.mxu0 0.0
  %414 = vmatprep.subr.mxu0 0.0
  %415 = vmatpush1.msra.mxu0 0.0
  %416 = vmatprep.subr.mxu0 0.0
  %417 = vmatpush1.msra.mxu0 0.0
  %418 = vmatprep.subr.mxu0 0.0
  %419 = vmatpush1.msra.mxu0 0.0
  %420 = vmatprep.subr.mxu0 0.0
  %421 = vmatpush1.msra.mxu0 0.0
  %422 = vmatprep.subr.mxu0 0.0
  %423 = vmatpush1.msra.mxu0 0.0
  %424 = vmatprep.subr.mxu0 0.0
  %425 = vmatpush1.msra.mxu0 0.0
  %426 = vmatprep.mubr.f32.mxu0 0.0
  %427 = vmatmul.mubr.f32.gmra.mrb[0].mxu0 %v358
  %v428 = vpop.f32.mrb[0].mxu0
  %v429 = vadd.f32 0.0, %v428
  %v430 = vpop.f32.mrb[0].mxu0
  %431 = vdwg.mxu0
  %v432 = vadd.f32 %v361, %v429
  %v433 = vtanh.pop %v432
  %434 = vst [vmem:[%s360] sm:$0x3] %v433
  %s435 = scalar_lea.vmem %s4, 8
  %v436 = vld [vmem:[%s435] sm:$0x3]
  %437 = vmatprep.subr.mxu0 0.0
  %438 = vmatpush1.msra.mxu0 %v114
  %439 = vmatprep.subr.mxu0 0.0
  %440 = vmatpush1.msra.mxu0 %v115
  %441 = vmatprep.subr.mxu0 0.0
  %442 = vmatpush1.msra.mxu0 %v116
  %443 = vmatprep.subr.mxu0 0.0
  %444 = vmatpush1.msra.mxu0 %v117
  %445 = vmatprep.subr.mxu0 0.0
  %446 = vmatpush1.msra.mxu0 %v118
  %447 = vmatprep.subr.mxu0 0.0
  %448 = vmatpush1.msra.mxu0 %v119
  %449 = vmatprep.subr.mxu0 0.0
  %450 = vmatpush1.msra.mxu0 %v120
  %451 = vmatprep.subr.mxu0 0.0
  %452 = vmatpush1.msra.mxu0 %v121
  %453 = vmatprep.subr.mxu0 0.0
  %454 = vmatpush1.msra.mxu0 %v122
  %455 = vmatprep.subr.mxu0 0.0
  %456 = vmatpush1.msra.mxu0 %v123
  %457 = vmatprep.subr.mxu0 0.0
  %458 = vmatpush1.msra.mxu0 %v124
  %459 = vmatprep.subr.mxu0 0.0
  %460 = vmatpush1.msra.mxu0 %v125
  %461 = vmatprep.subr.mxu0 0.0
  %462 = vmatpush1.msra.mxu0 %v126
  %463 = vmatprep.subr.mxu0 0.0
  %464 = vmatpush1.msra.mxu0 %v127
  %465 = vmatprep.subr.mxu0 0.0
  %466 = vmatpush1.msra.mxu0 %v128
  %467 = vmatprep.subr.mxu0 0.0
  %468 = vmatpush1.msra.mxu0 %v129
  %469 = vmatprep.subr.mxu0 0.0
  %470 = vmatpush1.msra.mxu0 0.0
  %471 = vmatprep.subr.mxu0 0.0
  %472 = vmatpush1.msra.mxu0 0.0
  %473 = vmatprep.subr.mxu0 0.0
  %474 = vmatpush1.msra.mxu0 0.0
  %475 = vmatprep.subr.mxu0 0.0
  %476 = vmatpush1.msra.mxu0 0.0
  %477 = vmatprep.subr.mxu0 0.0
  %478 = vmatpush1.msra.mxu0 0.0
  %479 = vmatprep.subr.mxu0 0.0
  %480 = vmatpush1.msra.mxu0 0.0
  %481 = vmatprep.subr.mxu0 0.0
  %482 = vmatpush1.msra.mxu0 0.0
  %483 = vmatprep.subr.mxu0 0.0
  %484 = vmatpush1.msra.mxu0 0.0
  %485 = vmatprep.subr.mxu0 0.0
  %486 = vmatpush1.msra.mxu0 0.0
  %487 = vmatprep.subr.mxu0 0.0
  %488 = vmatpush1.msra.mxu0 0.0
  %489 = vmatprep.subr.mxu0 0.0
  %490 = vmatpush1.msra.mxu0 0.0
  %491 = vmatprep.subr.mxu0 0.0
  %492 = vmatpush1.msra.mxu0 0.0
  %493 = vmatprep.subr.mxu0 0.0
  %494 = vmatpush1.msra.mxu0 0.0
  %495 = vmatprep.subr.mxu0 0.0
  %496 = vmatpush1.msra.mxu0 0.0
  %497 = vmatprep.subr.mxu0 0.0
  %498 = vmatpush1.msra.mxu0 0.0
  %499 = vmatprep.subr.mxu0 0.0
  %500 = vmatpush1.msra.mxu0 0.0
  %501 = vmatprep.mubr.f32.mxu0 0.0
  %502 = vmatmul.mubr.f32.gmra.mrb[0].mxu0 %v433
  %v503 = vpop.f32.mrb[0].mxu0
  %v504 = vadd.f32 0.0, %v503
  %v505 = vpop.f32.mrb[0].mxu0
  %506 = vdwg.mxu0
  %v507 = vadd.f32 %v436, %v504
  %v508 = vtanh.pop %v507
  %509 = vst [vmem:[%s435] sm:$0x3] %v508
  %s510 = scalar_lea.vmem %s4, 10
  %v511 = vld [vmem:[%s510] sm:$0x3]
  %512 = vmatprep.subr.mxu0 0.0
  %513 = vmatpush1.msra.mxu0 %v114
  %514 = vmatprep.subr.mxu0 0.0
  %515 = vmatpush1.msra.mxu0 %v115
  %516 = vmatprep.subr.mxu0 0.0
  %517 = vmatpush1.msra.mxu0 %v116
  %518 = vmatprep.subr.mxu0 0.0
  %519 = vmatpush1.msra.mxu0 %v117
  %520 = vmatprep.subr.mxu0 0.0
  %521 = vmatpush1.msra.mxu0 %v118
  %522 = vmatprep.subr.mxu0 0.0
  %523 = vmatpush1.msra.mxu0 %v119
  %524 = vmatprep.subr.mxu0 0.0
  %525 = vmatpush1.msra.mxu0 %v120
  %526 = vmatprep.subr.mxu0 0.0
  %527 = vmatpush1.msra.mxu0 %v121
  %528 = vmatprep.subr.mxu0 0.0
  %529 = vmatpush1.msra.mxu0 %v122
  %530 = vmatprep.subr.mxu0 0.0
  %531 = vmatpush1.msra.mxu0 %v123
  %532 = vmatprep.subr.mxu0 0.0
  %533 = vmatpush1.msra.mxu0 %v124
  %534 = vmatprep.subr.mxu0 0.0
  %535 = vmatpush1.msra.mxu0 %v125
  %536 = vmatprep.subr.mxu0 0.0
  %537 = vmatpush1.msra.mxu0 %v126
  %538 = vmatprep.subr.mxu0 0.0
  %539 = vmatpush1.msra.mxu0 %v127
  %540 = vmatprep.subr.mxu0 0.0
  %541 = vmatpush1.msra.mxu0 %v128
  %542 = vmatprep.subr.mxu0 0.0
  %543 = vmatpush1.msra.mxu0 %v129
  %544 = vmatprep.subr.mxu0 0.0
  %545 = vmatpush1.msra.mxu0 0.0
  %546 = vmatprep.subr.mxu0 0.0
  %547 = vmatpush1.msra.mxu0 0.0
  %548 = vmatprep.subr.mxu0 0.0
  %549 = vmatpush1.msra.mxu0 0.0
  %550 = vmatprep.subr.mxu0 0.0
  %551 = vmatpush1.msra.mxu0 0.0
  %552 = vmatprep.subr.mxu0 0.0
  %553 = vmatpush1.msra.mxu0 0.0
  %554 = vmatprep.subr.mxu0 0.0
  %555 = vmatpush1.msra.mxu0 0.0
  %556 = vmatprep.subr.mxu0 0.0
  %557 = vmatpush1.msra.mxu0 0.0
  %558 = vmatprep.subr.mxu0 0.0
  %559 = vmatpush1.msra.mxu0 0.0
  %560 = vmatprep.subr.mxu0 0.0
  %561 = vmatpush1.msra.mxu0 0.0
  %562 = vmatprep.subr.mxu0 0.0
  %563 = vmatpush1.msra.mxu0 0.0
  %564 = vmatprep.subr.mxu0 0.0
  %565 = vmatpush1.msra.mxu0 0.0
  %566 = vmatprep.subr.mxu0 0.0
  %567 = vmatpush1.msra.mxu0 0.0
  %568 = vmatprep.subr.mxu0 0.0
  %569 = vmatpush1.msra.mxu0 0.0
  %570 = vmatprep.subr.mxu0 0.0
  %571 = vmatpush1.msra.mxu0 0.0
  %572 = vmatprep.subr.mxu0 0.0
  %573 = vmatpush1.msra.mxu0 0.0
  %574 = vmatprep.subr.mxu0 0.0
  %575 = vmatpush1.msra.mxu0 0.0
  %576 = vmatprep.mubr.f32.mxu0 0.0
  %577 = vmatmul.mubr.f32.gmra.mrb[0].mxu0 %v508
  %v578 = vpop.f32.mrb[0].mxu0
  %v579 = vadd.f32 0.0, %v578
  %v580 = vpop.f32.mrb[0].mxu0
  %581 = vdwg.mxu0
  %v582 = vadd.f32 %v511, %v579
  %v583 = vtanh.pop %v582
  %584 = vst [vmem:[%s510] sm:$0x3] %v583
  %s585 = scalar_lea.vmem %s4, 12
  %v586 = vld [vmem:[%s585] sm:$0x3]
  %587 = vmatprep.subr.mxu0 0.0
  %588 = vmatpush1.msra.mxu0 %v114
  %589 = vmatprep.subr.mxu0 0.0
  %590 = vmatpush1.msra.mxu0 %v115
  %591 = vmatprep.subr.mxu0 0.0
  %592 = vmatpush1.msra.mxu0 %v116
  %593 = vmatprep.subr.mxu0 0.0
  %594 = vmatpush1.msra.mxu0 %v117
  %595 = vmatprep.subr.mxu0 0.0
  %596 = vmatpush1.msra.mxu0 %v118
  %597 = vmatprep.subr.mxu0 0.0
  %598 = vmatpush1.msra.mxu0 %v119
  %599 = vmatprep.subr.mxu0 0.0
  %600 = vmatpush1.msra.mxu0 %v120
  %601 = vmatprep.subr.mxu0 0.0
  %602 = vmatpush1.msra.mxu0 %v121
  %603 = vmatprep.subr.mxu0 0.0
  %604 = vmatpush1.msra.mxu0 %v122
  %605 = vmatprep.subr.mxu0 0.0
  %606 = vmatpush1.msra.mxu0 %v123
  %607 = vmatprep.subr.mxu0 0.0
  %608 = vmatpush1.msra.mxu0 %v124
  %609 = vmatprep.subr.mxu0 0.0
  %610 = vmatpush1.msra.mxu0 %v125
  %611 = vmatprep.subr.mxu0 0.0
  %612 = vmatpush1.msra.mxu0 %v126
  %613 = vmatprep.subr.mxu0 0.0
  %614 = vmatpush1.msra.mxu0 %v127
  %615 = vmatprep.subr.mxu0 0.0
  %616 = vmatpush1.msra.mxu0 %v128
  %617 = vmatprep.subr.mxu0 0.0
  %618 = vmatpush1.msra.mxu0 %v129
  %619 = vmatprep.subr.mxu0 0.0
  %620 = vmatpush1.msra.mxu0 0.0
  %621 = vmatprep.subr.mxu0 0.0
  %622 = vmatpush1.msra.mxu0 0.0
  %623 = vmatprep.subr.mxu0 0.0
  %624 = vmatpush1.msra.mxu0 0.0
  %625 = vmatprep.subr.mxu0 0.0
  %626 = vmatpush1.msra.mxu0 0.0
  %627 = vmatprep.subr.mxu0 0.0
  %628 = vmatpush1.msra.mxu0 0.0
  %629 = vmatprep.subr.mxu0 0.0
  %630 = vmatpush1.msra.mxu0 0.0
  %631 = vmatprep.subr.mxu0 0.0
  %632 = vmatpush1.msra.mxu0 0.0
  %633 = vmatprep.subr.mxu0 0.0
  %634 = vmatpush1.msra.mxu0 0.0
  %635 = vmatprep.subr.mxu0 0.0
  %636 = vmatpush1.msra.mxu0 0.0
  %637 = vmatprep.subr.mxu0 0.0
  %638 = vmatpush1.msra.mxu0 0.0
  %639 = vmatprep.subr.mxu0 0.0
  %640 = vmatpush1.msra.mxu0 0.0
  %641 = vmatprep.subr.mxu0 0.0
  %642 = vmatpush1.msra.mxu0 0.0
  %643 = vmatprep.subr.mxu0 0.0
  %644 = vmatpush1.msra.mxu0 0.0
  %645 = vmatprep.subr.mxu0 0.0
  %646 = vmatpush1.msra.mxu0 0.0
  %647 = vmatprep.subr.mxu0 0.0
  %648 = vmatpush1.msra.mxu0 0.0
  %649 = vmatprep.subr.mxu0 0.0
  %650 = vmatpush1.msra.mxu0 0.0
  %651 = vmatprep.mubr.f32.mxu0 0.0
  %652 = vmatmul.mubr.f32.gmra.mrb[0].mxu0 %v583
  %v653 = vpop.f32.mrb[0].mxu0
  %v654 = vadd.f32 0.0, %v653
  %v655 = vpop.f32.mrb[0].mxu0
  %656 = vdwg.mxu0
  %v657 = vadd.f32 %v586, %v654
  %v658 = vtanh.pop %v657
  %659 = vst [vmem:[%s585] sm:$0x3] %v658
  %s660 = scalar_lea.vmem %s4, 14
  %v661 = vld [vmem:[%s660] sm:$0x3]
  %662 = vmatprep.subr.mxu0 0.0
  %663 = vmatpush1.msra.mxu0 %v114
  %664 = vmatprep.subr.mxu0 0.0
  %665 = vmatpush1.msra.mxu0 %v115
  %666 = vmatprep.subr.mxu0 0.0
  %667 = vmatpush1.msra.mxu0 %v116
  %668 = vmatprep.subr.mxu0 0.0
  %669 = vmatpush1.msra.mxu0 %v117
  %670 = vmatprep.subr.mxu0 0.0
  %671 = vmatpush1.msra.mxu0 %v118
  %672 = vmatprep.subr.mxu0 0.0
  %673 = vmatpush1.msra.mxu0 %v119
  %674 = vmatprep.subr.mxu0 0.0
  %675 = vmatpush1.msra.mxu0 %v120
  %676 = vmatprep.subr.mxu0 0.0
  %677 = vmatpush1.msra.mxu0 %v121
  %678 = vmatprep.subr.mxu0 0.0
  %679 = vmatpush1.msra.mxu0 %v122
  %680 = vmatprep.subr.mxu0 0.0
  %681 = vmatpush1.msra.mxu0 %v123
  %682 = vmatprep.subr.mxu0 0.0
  %683 = vmatpush1.msra.mxu0 %v124
  %684 = vmatprep.subr.mxu0 0.0
  %685 = vmatpush1.msra.mxu0 %v125
  %686 = vmatprep.subr.mxu0 0.0
  %687 = vmatpush1.msra.mxu0 %v126
  %688 = vmatprep.subr.mxu0 0.0
  %689 = vmatpush1.msra.mxu0 %v127
  %690 = vmatprep.subr.mxu0 0.0
  %691 = vmatpush1.msra.mxu0 %v128
  %692 = vmatprep.subr.mxu0 0.0
  %693 = vmatpush1.msra.mxu0 %v129
  %694 = vmatprep.subr.mxu0 0.0
  %695 = vmatpush1.msra.mxu0 0.0
  %696 = vmatprep.subr.mxu0 0.0
  %697 = vmatpush1.msra.mxu0 0.0
  %698 = vmatprep.subr.mxu0 0.0
  %699 = vmatpush1.msra.mxu0 0.0
  %700 = vmatprep.subr.mxu0 0.0
  %701 = vmatpush1.msra.mxu0 0.0
  %702 = vmatprep.subr.mxu0 0.0
  %703 = vmatpush1.msra.mxu0 0.0
  %704 = vmatprep.subr.mxu0 0.0
  %705 = vmatpush1.msra.mxu0 0.0
  %706 = vmatprep.subr.mxu0 0.0
  %707 = vmatpush1.msra.mxu0 0.0
  %708 = vmatprep.subr.mxu0 0.0
  %709 = vmatpush1.msra.mxu0 0.0
  %710 = vmatprep.subr.mxu0 0.0
  %711 = vmatpush1.msra.mxu0 0.0
  %712 = vmatprep.subr.mxu0 0.0
  %713 = vmatpush1.msra.mxu0 0.0
  %714 = vmatprep.subr.mxu0 0.0
  %715 = vmatpush1.msra.mxu0 0.0
  %716 = vmatprep.subr.mxu0 0.0
  %717 = vmatpush1.msra.mxu0 0.0
  %718 = vmatprep.subr.mxu0 0.0
  %719 = vmatpush1.msra.mxu0 0.0
  %720 = vmatprep.subr.mxu0 0.0
  %721 = vmatpush1.msra.mxu0 0.0
  %722 = vmatprep.subr.mxu0 0.0
  %723 = vmatpush1.msra.mxu0 0.0
  %724 = vmatprep.subr.mxu0 0.0
  %725 = vmatpush1.msra.mxu0 0.0
  %726 = vmatprep.mubr.f32.mxu0 0.0
  %727 = vmatmul.mubr.f32.gmra.mrb[0].mxu0 %v658
  %v728 = vpop.f32.mrb[0].mxu0
  %v729 = vadd.f32 0.0, %v728
  %v730 = vpop.f32.mrb[0].mxu0
  %731 = vdwg.mxu0
  %v732 = vadd.f32 %v661, %v729
  %v733 = vtanh.pop %v732
  %734 = vst [vmem:[%s660] sm:$0x3] %v733
  %735 = vst [vmem:[#allocation2] sm:$0x3] %v733
  // Predicated region
  $region18: #{rnn_forward.3} parent=0 // pred_check
    _
  $region19: #{rnn_forward.3} parent=0 // pred_check_branch
    %737 = sbr.rel (0) target = $region21
  $region20: #{rnn_forward.3} parent=0 // pred_region
    _
  $region21: #{rnn_forward.3} parent=0 // pred_fallthru
    _
  // Predicated region
  $region22: #{rnn_forward.3} parent=0 // pred_check
    _
  $region23: #{rnn_forward.3} parent=0 // pred_check_branch
    %739 = sbr.rel (0) target = $region25
  $region24: #{rnn_forward.3} parent=0 // pred_region
    _
  $region25: #{rnn_forward.3} parent=0 // pred_fallthru
    _

</llo_original>
